<compile_context>
chip_gen: v5e
topology: v5e:2x2
jax: 0.10.0
libtpu: 0.0.40
codegen_flags: <defaults>
</compile_context>

<pallas_src>
import functools

import jax
import jax.numpy as jnp
from jax import lax
from jax.experimental import pallas as pl
from jax.experimental.pallas import tpu as pltpu

NUM_HEADS = 6
DIM_S = 384
DIM_T = 1024


# ----------------------------------------------------------------------------
# small helpers
# ----------------------------------------------------------------------------

def _round_up(x, m):
    return (x + m - 1) // m * m


@functools.lru_cache(maxsize=None)
def _vmem_limit():
    """Per-generation scoped-VMEM budget (v5e/v6e: 96 MiB, v7x: ~48 MiB)."""
    try:
        phys = int(pltpu.get_tpu_info().vmem_capacity_bytes)
        return max(32 * 1024 * 1024, min(phys * 3 // 4, 96 * 1024 * 1024))
    except Exception:
        return 32 * 1024 * 1024


def _pick_tile(d, cap, align):
    """Tile <= cap (multiple of `align`); prefers exact division, else big tiles."""
    d = _round_up(d, align)
    if d <= cap:
        return d
    best = align
    for t in range(cap, align - 1, -align):
        if d % t == 0:
            best = t
            break
    if best * 2 >= cap:
        return best
    return cap           # accept padding rather than tiny MXU-starving tiles


def _interp_matrix(n_in, n_out):
    """Row-interpolation matrix for F.interpolate(mode='bilinear', align_corners=True)."""
    idx = jnp.arange(n_out)
    if n_out > 1:
        src = idx.astype(jnp.float32) * (float(n_in - 1) / float(n_out - 1))
    else:
        src = jnp.zeros((n_out,), jnp.float32)
    lo = jnp.clip(jnp.floor(src).astype(jnp.int32), 0, n_in - 1)
    hi = jnp.clip(lo + 1, 0, n_in - 1)
    frac = src - lo.astype(jnp.float32)
    M = jnp.zeros((n_out, n_in), jnp.float32)
    M = M.at[idx, lo].add(1.0 - frac)
    M = M.at[idx, hi].add(frac)
    return M


# ----------------------------------------------------------------------------
# Tiled matmul kernels (bf16 operands, f32 VMEM accumulator)
# ----------------------------------------------------------------------------

def _matmul_kernel(x_ref, w_ref, b_ref, o_ref, acc_ref, *, act):
    @pl.when(pl.program_id(2) == 0)
    def _():
        acc_ref[...] = jnp.zeros_like(acc_ref)

    acc_ref[...] += jnp.dot(x_ref[...], w_ref[...],
                            preferred_element_type=jnp.float32)

    @pl.when(pl.program_id(2) == pl.num_programs(2) - 1)
    def _():
        y = acc_ref[...] + b_ref[...]
        if act == "relu":
            y = jnp.maximum(y, 0.0)
        elif act == "gelu":
            y = jax.nn.gelu(y, approximate=False)   # torch nn.GELU default (erf)
        o_ref[...] = y.astype(o_ref.dtype)


def _matmul_res_kernel(x_ref, w_ref, b_ref, r_ref, o_ref, acc_ref, *, act):
    @pl.when(pl.program_id(2) == 0)
    def _():
        acc_ref[...] = jnp.zeros_like(acc_ref)

    acc_ref[...] += jnp.dot(x_ref[...], w_ref[...],
                            preferred_element_type=jnp.float32)

    @pl.when(pl.program_id(2) == pl.num_programs(2) - 1)
    def _():
        y = acc_ref[...] + b_ref[...]
        if act == "relu":
            y = jnp.maximum(y, 0.0)
        elif act == "gelu":
            y = jax.nn.gelu(y, approximate=False)
        y = y + r_ref[...].astype(jnp.float32)
        o_ref[...] = y.astype(o_ref.dtype)


def pallas_matmul(x, w, b=None, act=None, residual=None, out_dtype=jnp.bfloat16):
    """y = act(x @ w + b) [+ residual]; x:(M,K), w:(K,N).  bf16 MXU / f32 accum."""
    M, K = x.shape
    N = w.shape[1]
    tm = _pick_tile(M, 256, 16)
    tn = _pick_tile(N, 512, 128)
    tk = _pick_tile(K, 512, 128)
    Mp, Np, Kp = _round_up(M, tm), _round_up(N, tn), _round_up(K, tk)

    xb = x.astype(jnp.bfloat16)
    wb = w.astype(jnp.bfloat16)
    if (Mp, Kp) != (M, K):
        xb = jnp.pad(xb, ((0, Mp - M), (0, Kp - K)))
    if (Kp, Np) != (K, N):
        wb = jnp.pad(wb, ((0, Kp - K), (0, Np - N)))
    bvec = jnp.zeros((N,), jnp.float32) if b is None else b.astype(jnp.float32)
    b2 = jnp.pad(bvec, (0, Np - N)).reshape(1, Np)

    in_specs = [pl.BlockSpec((tm, tk), lambda i, j, k: (i, k)),
                pl.BlockSpec((tk, tn), lambda i, j, k: (k, j)),
                pl.BlockSpec((1, tn), lambda i, j, k: (0, j))]
    args = [xb, wb, b2]
    out_bytes = jnp.dtype(out_dtype).itemsize
    bytes_accessed = M * K * 2 + K * N * 2 + M * N * out_bytes
    if residual is not None:
        r = residual.astype(jnp.bfloat16)            # bf16 residual DMA (review item)
        if (Mp, Np) != (M, N):
            r = jnp.pad(r, ((0, Mp - M), (0, Np - N)))
        in_specs.append(pl.BlockSpec((tm, tn), lambda i, j, k: (i, j)))
        args.append(r)
        bytes_accessed += M * N * 2
        kern = functools.partial(_matmul_res_kernel, act=act)
    else:
        kern = functools.partial(_matmul_kernel, act=act)

    out = pl.pallas_call(
        kern,
        grid=(Mp // tm, Np // tn, Kp // tk),
        in_specs=in_specs,
        out_specs=pl.BlockSpec((tm, tn), lambda i, j, k: (i, j)),
        out_shape=jax.ShapeDtypeStruct((Mp, Np), out_dtype),
        scratch_shapes=[pltpu.VMEM((tm, tn), jnp.float32)],
        compiler_params=pltpu.CompilerParams(
            dimension_semantics=("parallel", "parallel", "arbitrary"),
            vmem_limit_bytes=_vmem_limit()),
        cost_estimate=pl.CostEstimate(flops=2 * M * N * K, transcendentals=0,
                                      bytes_accessed=bytes_accessed),
    )(*args)
    if (Mp, Np) != (M, N):
        out = out[:M, :N]
    return out


# ----------------------------------------------------------------------------
# Fused LayerNorm + matmul (K untiled, single N block -> LN computed once)
# ----------------------------------------------------------------------------

def _ln_matmul_kernel(x_ref, g_ref, bt_ref, w_ref, b_ref, o_ref, *, eps, act):
    x = x_ref[...].astype(jnp.float32)
    mu = jnp.mean(x, axis=-1, keepdims=True)
    xc = x - mu
    var = jnp.mean(xc * xc, axis=-1, keepdims=True)
    xn = xc * lax.rsqrt(var + eps)
    xn = xn * g_ref[...] + bt_ref[...]
    y = jnp.dot(xn.astype(jnp.bfloat16), w_ref[...],
                preferred_element_type=jnp.float32) + b_ref[...]
    if act == "relu":
        y = jnp.maximum(y, 0.0)
    elif act == "gelu":
        y = jax.nn.gelu(y, approximate=False)
    o_ref[...] = y.astype(o_ref.dtype)


def pallas_ln_matmul(x, gamma, beta, w, b, act=None, eps=1e-6,
                     out_dtype=jnp.bfloat16):
    """y = act(LayerNorm(x) @ w + b); x:(M,K), K multiple of 128 (384 / 1024)."""
    M, K = x.shape
    N = w.shape[1]
    assert K % 128 == 0
    tm = _pick_tile(M, 256, 16)
    tn = _pick_tile(N, 1536, 128)     # single N block for every projection here
    Mp, Np = _round_up(M, tm), _round_up(N, tn)

    xp = x.astype(jnp.float32)        # keep LN stats / residual stream in f32
    if Mp != M:
        xp = jnp.pad(xp, ((0, Mp - M), (0, 0)))
    wb = w.astype(jnp.bfloat16)
    if Np != N:
        wb = jnp.pad(wb, ((0, 0), (0, Np - N)))
    b2 = jnp.pad(b.astype(jnp.float32), (0, Np - N)).reshape(1, Np)
    g2 = gamma.astype(jnp.float32).reshape(1, K)
    be2 = beta.astype(jnp.float32).reshape(1, K)

    kern = functools.partial(_ln_matmul_kernel, eps=eps, act=act)
    out = pl.pallas_call(
        kern,
        grid=(Mp // tm, Np // tn),
        in_specs=[pl.BlockSpec((tm, K), lambda i, j: (i, 0)),
                  pl.BlockSpec((1, K), lambda i, j: (0, 0)),
                  pl.BlockSpec((1, K), lambda i, j: (0, 0)),
                  pl.BlockSpec((K, tn), lambda i, j: (0, j)),
                  pl.BlockSpec((1, tn), lambda i, j: (0, j))],
        out_specs=pl.BlockSpec((tm, tn), lambda i, j: (i, j)),
        out_shape=jax.ShapeDtypeStruct((Mp, Np), out_dtype),
        compiler_params=pltpu.CompilerParams(
            dimension_semantics=("parallel", "parallel"),
            vmem_limit_bytes=_vmem_limit()),
        cost_estimate=pl.CostEstimate(flops=2 * M * N * K, transcendentals=0,
                                      bytes_accessed=M * K * 4 + K * N * 2 + M * N * 2),
    )(xp, g2, be2, wb, b2)
    if (Mp, Np) != (M, N):
        out = out[:M, :N]
    return out


# ----------------------------------------------------------------------------
# Attention kernel: all heads of one batch element, bf16 operands / f32 accum
# ----------------------------------------------------------------------------

def _attn_kernel(q_ref, k_ref, v_ref, o_ref, *, scale, num_heads):
    for h in range(num_heads):
        q = q_ref[0, h]                              # (N, Dh) bf16
        k = k_ref[0, h]                              # (M, Dh) bf16
        v = v_ref[0, h]                              # (M, Dh) bf16
        # NT contraction: no explicit transpose of k through the XLU.
        s = lax.dot_general(q, k, (((1,), (1,)), ((), ())),
                            preferred_element_type=jnp.float32) * scale
        s = s - jnp.max(s, axis=-1, keepdims=True)
        p = jnp.exp(s)
        denom = jnp.sum(p, axis=-1, keepdims=True)
        p = p * pl.reciprocal(denom, approx=True)
        o = jnp.dot(p.astype(jnp.bfloat16), v, preferred_element_type=jnp.float32)
        o_ref[0, h] = o.astype(o_ref.dtype)


def pallas_attention(q, k, v):
    """q:(B,H,N,Dh), k/v:(B,H,M,Dh) -> softmax(q k^T / sqrt(Dh)) v, bf16 out."""
    B, NH, N, Dh = q.shape
    M = k.shape[2]
    kern = functools.partial(_attn_kernel, scale=Dh ** -0.5, num_heads=NH)
    return pl.pallas_call(
        kern,
        grid=(B,),
        in_specs=[pl.BlockSpec((1, NH, N, Dh), lambda b: (b, 0, 0, 0)),
                  pl.BlockSpec((1, NH, M, Dh), lambda b: (b, 0, 0, 0)),
                  pl.BlockSpec((1, NH, M, Dh), lambda b: (b, 0, 0, 0))],
        out_specs=pl.BlockSpec((1, NH, N, Dh), lambda b: (b, 0, 0, 0)),
        out_shape=jax.ShapeDtypeStruct((B, NH, N, Dh), jnp.bfloat16),
        compiler_params=pltpu.CompilerParams(
            dimension_semantics=("parallel",), vmem_limit_bytes=_vmem_limit()),
    )(q.astype(jnp.bfloat16), k.astype(jnp.bfloat16), v.astype(jnp.bfloat16))


# ----------------------------------------------------------------------------
# 3x3 stride-1 conv: row-banded in-kernel 9-tap accumulation, channels-last
# ----------------------------------------------------------------------------

def _conv3x3_kernel(x_ref, w_ref, b_ref, o_ref, *, Wp, Cin, act, in_relu):
    # x_ref: (1, (TH+3)*Wp, Cin) flat padded band; w_ref: (9*Cin, Cout)
    nrow = o_ref.shape[1]
    acc = jnp.zeros((nrow, o_ref.shape[2]), jnp.float32)
    for di in range(3):
        for dj in range(3):
            off = di * Wp + dj
            win = x_ref[0, pl.ds(off, nrow), :]      # (nrow, Cin), bf16
            if in_relu:
                win = jnp.maximum(win, 0)
            wt = w_ref[pl.ds((di * 3 + dj) * Cin, Cin), :]
            acc = acc + jnp.dot(win, wt, preferred_element_type=jnp.float32)
    y = acc + b_ref[...]
    if act == "relu":
        y = jnp.maximum(y, 0.0)
    o_ref[0] = y.astype(o_ref.dtype)


def conv3x3_s1(x, w, b=None, act=None, in_relu=False, out_dtype=jnp.bfloat16,
               band_rows=None):
    """x: (B,H,W,Cin) NHWC; w: torch (Cout,Cin,3,3); padding=1, stride=1.

    Row-banded: grid runs over (batch x band); each band keeps only a
    (TH+3)-row halo window + a (TH*Wp, Cout) accumulator resident in VMEM.
    """
    B, H, W, Cin = x.shape
    Cout = w.shape[0]
    Wp = W + 2
    if band_rows is None:
        per_row = Wp * (Cin * 2 + Cout * 6)          # bf16 in + f32 acc + bf16 out
        band_rows = max(8, min(128, (4 * 1024 * 1024) // max(per_row, 1)))
    if band_rows >= H:
        TH, nb = H, 1
    else:
        TH = max(16, band_rows // 16 * 16)           # 16-aligned band -> clean tiles
        nb = -(-H // TH)
    Hout = nb * TH
    Hp = Hout + 3
    xp = jnp.pad(x.astype(jnp.bfloat16), ((0, 0), (1, Hp - 1 - H), (1, 1), (0, 0)))
    if nb == 1:
        xb = xp.reshape(B, Hp * Wp, Cin)
    else:
        xb = jnp.stack([xp[:, c * TH: c * TH + TH + 3] for c in range(nb)], axis=1)
        xb = xb.reshape(B * nb, (TH + 3) * Wp, Cin)
    w2 = w.transpose(2, 3, 1, 0).reshape(9 * Cin, Cout).astype(jnp.bfloat16)
    bvec = jnp.zeros((Cout,), jnp.float32) if b is None else b.astype(jnp.float32)
    b2 = bvec.reshape(1, Cout)
    nrow = TH * Wp
    G = B * nb

    kern = functools.partial(_conv3x3_kernel, Wp=Wp, Cin=Cin, act=act, in_relu=in_relu)
    out = pl.pallas_call(
        kern,
        grid=(G,),
        in_specs=[pl.BlockSpec((1, (TH + 3) * Wp, Cin), lambda g: (g, 0, 0)),
                  pl.BlockSpec((9 * Cin, Cout), lambda g: (0, 0)),
                  pl.BlockSpec((1, Cout), lambda g: (0, 0))],
        out_specs=pl.BlockSpec((1, nrow, Cout), lambda g: (g, 0, 0)),
        out_shape=jax.ShapeDtypeStruct((G, nrow, Cout), out_dtype),
        compiler_params=pltpu.CompilerParams(
            dimension_semantics=("parallel",), vmem_limit_bytes=_vmem_limit()),
        cost_estimate=pl.CostEstimate(
            flops=2 * G * nrow * 9 * Cin * Cout, transcendentals=0,
            bytes_accessed=G * ((TH + 3) * Wp * Cin * 2 + nrow * Cout * 2)
            + 9 * Cin * Cout * 2),
    )(xb, w2, b2)
    return out.reshape(B, Hout, Wp, Cout)[:, :H, :W, :]


def conv3x3_s2(x, w, b=None, out_dtype=jnp.bfloat16):
    """Stride-2 3x3 conv (only resize_layers[3], smallest map) via im2col + matmul."""
    B, H, W, Cin = x.shape
    Cout = w.shape[0]
    xp = jnp.pad(x, ((0, 0), (1, 1), (1, 1), (0, 0)))
    Ho = (H + 2 - 3) // 2 + 1
    Wo = (W + 2 - 3) // 2 + 1
    cols = [xp[:, di:di + 2 * (Ho - 1) + 1:2, dj:dj + 2 * (Wo - 1) + 1:2, :]
            for di in range(3) for dj in range(3)]
    patches = jnp.stack(cols, axis=3).reshape(B * Ho * Wo, 9 * Cin)
    w2 = w.transpose(2, 3, 1, 0).reshape(9 * Cin, Cout)
    y = pallas_matmul(patches, w2, b, out_dtype=out_dtype)
    return y.reshape(B, Ho, Wo, Cout)


def conv1x1(x, w, b=None, act=None, out_dtype=jnp.bfloat16):
    B, H, W, Cin = x.shape
    Cout = w.shape[0]
    y = pallas_matmul(x.reshape(B * H * W, Cin), w.reshape(Cout, Cin).T, b,
                      act=act, out_dtype=out_dtype)
    return y.reshape(B, H, W, Cout)


def conv_transpose_ks(x, w, b, k):
    """ConvTranspose2d with kernel_size == stride == k, padding 0 (channels-last).

    Weight is laid out (Cin, k, k, Cout) so the pixel shuffle keeps (k, Cout)
    contiguous (block-contiguous copy instead of channel-minor shuffle)."""
    B, H, W, Cin = x.shape
    Cout = w.shape[1]
    w2 = w.transpose(0, 2, 3, 1).reshape(Cin, k * k * Cout)
    bf = jnp.tile(b, k * k) if b is not None else None
    y = pallas_matmul(x.reshape(B * H * W, Cin), w2, bf, out_dtype=jnp.bfloat16)
    y = y.reshape(B, H, W, k, k, Cout).transpose(0, 1, 3, 2, 4, 5)
    return y.reshape(B, H * k, W * k, Cout)


# ----------------------------------------------------------------------------
# Bilinear resize (align_corners=True), NHWC, bf16 operands, lane-dense
# ----------------------------------------------------------------------------

def _resize_w_kernel(mw_ref, x_ref, o_ref):
    mw = mw_ref[...]
    for r in range(x_ref.shape[0]):
        o_ref[r] = jnp.dot(mw, x_ref[r],
                           preferred_element_type=jnp.float32).astype(o_ref.dtype)


def _resize_h_kernel(mh_ref, x_ref, o_ref):
    o_ref[0] = jnp.dot(mh_ref[...], x_ref[0],
                       preferred_element_type=jnp.float32).astype(o_ref.dtype)


def bilinear_resize_nhwc(x, out_h, out_w, out_dtype=jnp.bfloat16):
    B, H, W, C = x.shape
    OH, OW = int(out_h), int(out_w)
    if H == OH and W == OW:
        return x.astype(out_dtype)

    TR = min(32, _round_up(H, 8))
    Hp = _round_up(H, TR)
    xh = x.astype(jnp.bfloat16)
    if Hp != H:
        xh = jnp.pad(xh, ((0, 0), (0, Hp - H), (0, 0), (0, 0)))

    # ---- width pass ----
    if W == OW:
        y1 = xh
    elif W == 1:
        y1 = jnp.broadcast_to(xh, (B, Hp, OW, C))    # align_corners: replicate column
    else:
        Mw = _interp_matrix(W, OW).astype(jnp.bfloat16)
        xr = xh.reshape(B * Hp, W, C)
        y1 = pl.pallas_call(
            _resize_w_kernel,
            grid=(B * Hp // TR,),
            in_specs=[pl.BlockSpec((OW, W), lambda i: (0, 0)),
                      pl.BlockSpec((TR, W, C), lambda i: (i, 0, 0))],
            out_specs=pl.BlockSpec((TR, OW, C), lambda i: (i, 0, 0)),
            out_shape=jax.ShapeDtypeStruct((B * Hp, OW, C), jnp.bfloat16),
            compiler_params=pltpu.CompilerParams(
                dimension_semantics=("parallel",), vmem_limit_bytes=_vmem_limit()),
        )(Mw, xr)
        y1 = y1.reshape(B, Hp, OW, C)

    # ---- height pass ----
    if H == OH:
        y = y1[:, :H] if Hp != H else y1
        return y.astype(out_dtype)
    Mh = jnp.pad(_interp_matrix(H, OH), ((0, 0), (0, Hp - H))).astype(jnp.bfloat16)
    t = y1.reshape(B, Hp, OW * C).astype(jnp.bfloat16)
    ncol = OW * C
    if ncol > 4096:
        tcol = _pick_tile(ncol, 4096, 128)
        ncolp = _round_up(ncol, tcol)
        if ncolp != ncol:
            t = jnp.pad(t, ((0, 0), (0, 0), (0, ncolp - ncol)))
    else:
        tcol, ncolp = ncol, ncol
    y2 = pl.pallas_call(
        _resize_h_kernel,
        grid=(B, ncolp // tcol),
        in_specs=[pl.BlockSpec((OH, Hp), lambda b, j: (0, 0)),
                  pl.BlockSpec((1, Hp, tcol), lambda b, j: (b, 0, j))],
        out_specs=pl.BlockSpec((1, OH, tcol), lambda b, j: (b, 0, j)),
        out_shape=jax.ShapeDtypeStruct((B, OH, ncolp), jnp.bfloat16),
        compiler_params=pltpu.CompilerParams(
            dimension_semantics=("parallel", "parallel"),
            vmem_limit_bytes=_vmem_limit()),
    )(Mh, t)
    if ncolp != ncol:
        y2 = y2[:, :, :ncol]
    return y2.reshape(B, OH, OW, C).astype(out_dtype)


# ----------------------------------------------------------------------------
# Final fused kernel: (optional) resize -> ReLU -> per-batch min/max normalize
# Identity fast path when (H, W) == (out_h, out_w).  Exact divide for the norm.
# ----------------------------------------------------------------------------

def _final_norm_kernel(x_ref, o_ref, *, do_norm):
    y = jnp.maximum(x_ref[0], 0.0)
    if do_norm:
        mn = jnp.min(y, keepdims=True)
        mx = jnp.max(y, keepdims=True)
        y = (y - mn) / (mx - mn + 1e-6)
    o_ref[0] = y.astype(o_ref.dtype)


def _final_resize_kernel(mh_ref, mwt_ref, x_ref, o_ref, *, do_norm):
    t = jnp.dot(mh_ref[...], x_ref[0], preferred_element_type=jnp.float32)
    y = jnp.dot(t, mwt_ref[...], preferred_element_type=jnp.float32)
    y = jnp.maximum(y, 0.0)
    if do_norm:
        mn = jnp.min(y, keepdims=True)
        mx = jnp.max(y, keepdims=True)
        y = (y - mn) / (mx - mn + 1e-6)
    o_ref[0] = y.astype(o_ref.dtype)


def final_resize_relu_norm(d2, out_h, out_w, do_norm):
    """d2: (B, H, W) depth planes -> (B, out_h, out_w)."""
    B, H, W = d2.shape
    OH, OW = int(out_h), int(out_w)
    x = d2.astype(jnp.float32)
    if (H, W) == (OH, OW):
        kern = functools.partial(_final_norm_kernel, do_norm=do_norm)
        return pl.pallas_call(
            kern, grid=(B,),
            in_specs=[pl.BlockSpec((1, H, W), lambda b: (b, 0, 0))],
            out_specs=pl.BlockSpec((1, H, W), lambda b: (b, 0, 0)),
            out_shape=jax.ShapeDtypeStruct((B, H, W), jnp.float32),
            compiler_params=pltpu.CompilerParams(
                dimension_semantics=("parallel",), vmem_limit_bytes=_vmem_limit()),
        )(x)
    Mh = _interp_matrix(H, OH)
    MwT = _interp_matrix(W, OW).T
    kern = functools.partial(_final_resize_kernel, do_norm=do_norm)
    return pl.pallas_call(
        kern, grid=(B,),
        in_specs=[pl.BlockSpec((OH, H), lambda b: (0, 0)),
                  pl.BlockSpec((W, OW), lambda b: (0, 0)),
                  pl.BlockSpec((1, H, W), lambda b: (b, 0, 0))],
        out_specs=pl.BlockSpec((1, OH, OW), lambda b: (b, 0, 0)),
        out_shape=jax.ShapeDtypeStruct((B, OH, OW), jnp.float32),
        compiler_params=pltpu.CompilerParams(
            dimension_semantics=("parallel",), vmem_limit_bytes=_vmem_limit()),
    )(Mh, MwT, x)


# ----------------------------------------------------------------------------
# Transformer blocks (pre-norm, LN fused into projections, fused QKV weights)
# ----------------------------------------------------------------------------

def _split_heads(t, B, L):
    return t.reshape(B, L, NUM_HEADS, -1).transpose(0, 2, 1, 3)


def _merge_heads(o):
    B, NH, L, Dh = o.shape
    return o.transpose(0, 2, 1, 3).reshape(B * L, NH * Dh)


def _attn_core(q, k, v, B, N, M):
    qh = _split_heads(q, B, N)
    kh = _split_heads(k, B, M)
    vh = _split_heads(v, B, M)
    o = pallas_attention(qh, kh, vh)
    return _merge_heads(o)


def _mlp_residual(x_flat, p, pre_ln, pre_mlp):
    h = pallas_ln_matmul(x_flat, p[pre_ln + "_g"], p[pre_ln + "_b"],
                         p[pre_mlp + "w1"], p[pre_mlp + "b1"], act="gelu",
                         out_dtype=jnp.bfloat16)
    return pallas_matmul(h, p[pre_mlp + "w2"], p[pre_mlp + "b2"],
                         residual=x_flat, out_dtype=jnp.float32)


def cross_block(xq, xkv, p, pre):
    """Pre-norm cross-attention block (channel-based & standard cross)."""
    B, N, Dq = xq.shape
    M = xkv.shape[1]
    xq_f = xq.reshape(B * N, Dq)
    xkv_f = xkv.reshape(B * M, xkv.shape[2])
    q = pallas_ln_matmul(xq_f, p[pre + "ln1q_g"], p[pre + "ln1q_b"],
                         p[pre + "attn_wq"], p[pre + "attn_bq"])
    kv = pallas_ln_matmul(xkv_f, p[pre + "ln1kv_g"], p[pre + "ln1kv_b"],
                          p[pre + "attn_wkv"], p[pre + "attn_bkv"])
    k, v = kv[:, :DIM_S], kv[:, DIM_S:]
    o = _attn_core(q, k, v, B, N, M)
    x = pallas_matmul(o, p[pre + "attn_wo"], p[pre + "attn_bo"],
                      residual=xq_f, out_dtype=jnp.float32)
    out = _mlp_residual(x, p, pre + "ln2", pre + "mlp_")
    return out.reshape(B, N, DIM_S)


def self_block(x, p, pre):
    B, N, D = x.shape
    xf = x.reshape(B * N, D)
    qkv = pallas_ln_matmul(xf, p[pre + "ln1_g"], p[pre + "ln1_b"],
                           p[pre + "attn_wqkv"], p[pre + "attn_bqkv"])
    q, k, v = qkv[:, :D], qkv[:, D:2 * D], qkv[:, 2 * D:]
    o = _attn_core(q, k, v, B, N, N)
    xr = pallas_matmul(o, p[pre + "attn_wo"], p[pre + "attn_bo"],
                       residual=xf, out_dtype=jnp.float32)
    out = _mlp_residual(xr, p, pre + "ln2", pre + "mlp_")
    return out.reshape(B, N, D)


# ----------------------------------------------------------------------------
# DPT head (channels-last, bf16 activations)
# ----------------------------------------------------------------------------

def residual_conv_unit(x, p, pre):
    # out = conv2(relu(conv1(relu(x)))) + x   (ReLU applied in-kernel on the taps)
    h = conv3x3_s1(x, p[pre + "c1w"], p[pre + "c1b"], in_relu=True)
    h = conv3x3_s1(h, p[pre + "c2w"], p[pre + "c2b"], in_relu=True)
    return h + x


def feature_fusion(p, pre, x0, x1=None, size=None):
    out = x0
    if x1 is not None:
        out = out + residual_conv_unit(x1, p, pre + "rcu1_")
    out = residual_conv_unit(out, p, pre + "rcu2_")
    if size is None:
        oh, ow = out.shape[1] * 2, out.shape[2] * 2   # scale_factor=2
    else:
        oh, ow = size
    out = bilinear_resize_nhwc(out, oh, ow)            # align_corners=True
    out = conv1x1(out, p[pre + "ocw"], p[pre + "ocb"])
    return out


def depth_head_forward(feats, p, patch_h, patch_w):
    B = feats[0].shape[0]
    outs = []
    for i, f in enumerate(feats):
        x = f.reshape(B, patch_h, patch_w, DIM_S)           # NHWC (tokens row-major)
        x = conv1x1(x, p[f"proj{i}_w"], p[f"proj{i}_b"])
        if i == 0:
            x = conv_transpose_ks(x, p["resize0_w"], p["resize0_b"], 4)
        elif i == 1:
            x = conv_transpose_ks(x, p["resize1_w"], p["resize1_b"], 2)
        elif i == 3:
            x = conv3x3_s2(x, p["resize3_w"], p["resize3_b"])
        outs.append(x)
    l1, l2, l3, l4 = outs
    l1r = conv3x3_s1(l1, p["l1rn_w"])
    l2r = conv3x3_s1(l2, p["l2rn_w"])
    l3r = conv3x3_s1(l3, p["l3rn_w"])
    l4r = conv3x3_s1(l4, p["l4rn_w"])

    p4 = feature_fusion(p, "ref4_", l4r, None, size=l3r.shape[1:3])
    p3 = feature_fusion(p, "ref3_", p4, l3r, size=l2r.shape[1:3])
    p2 = feature_fusion(p, "ref2_", p3, l2r, size=l1r.shape[1:3])
    p1 = feature_fusion(p, "ref1_", p2, l1r, size=None)

    out = conv3x3_s1(p1, p["oc1_w"], p["oc1_b"])
    out = bilinear_resize_nhwc(out, patch_h * 14, patch_w * 14)
    out = conv3x3_s1(out, p["oc2a_w"], p["oc2a_b"], act="relu")
    # 1x1 conv to a single channel + ReLU; keep the result as (B, H, W) planes.
    B2, Hh, Ww, _ = out.shape
    d = pallas_matmul(out.reshape(B2 * Hh * Ww, 32),
                      p["oc2b_w"].reshape(1, 32).T, p["oc2b_b"], act="relu",
                      out_dtype=jnp.float32)
    return d.reshape(B2, Hh, Ww)


# ----------------------------------------------------------------------------
# Full AsymKD_compress forward
# ----------------------------------------------------------------------------

def asymkd_compress_forward(x, teacher_features, student_features, params,
                            training=True):
    h, w = x.shape[-2:]
    patch_h, patch_w = h // 14, w // 14
    proj_feature = []
    for i in range(4):
        sf = student_features[i]          # (B, N, 384)
        tf = teacher_features[i]          # (B, N, 1024)
        channel_proj = cross_block(sf, tf, params, f"ch{i}_")
        feat = cross_block(sf, channel_proj, params, f"cr{i}_")
        feat = self_block(feat, params, f"sa{i}_")
        proj_feature.append(feat)
    depth = depth_head_forward(proj_feature, params, patch_h, patch_w)
    # interpolate to (h, w) + F.relu + (training) NormalizeLayer in one fused kernel
    depth = final_resize_relu_norm(depth, h, w, do_norm=training)
    return depth.reshape(depth.shape[0], 1, h, w)


# ----------------------------------------------------------------------------
# Deterministic parameter initialization (synthetic — shapes from __init__)
# ----------------------------------------------------------------------------

class ParamGen:
    def __init__(self, key):
        self.key = key

    def __call__(self, shape, scale=0.02):
        self.key, sub = jax.random.split(self.key)
        return (scale * jax.random.normal(sub, shape)).astype(jnp.float32)


def init_params(key):
    pg = ParamGen(key)
    P = {}

    def ln(name, d):
        P[name + "_g"] = jnp.ones((d,), jnp.float32)
        P[name + "_b"] = jnp.zeros((d,), jnp.float32)

    def attn_cross(pre, dkv):           # fused K|V weights built at init
        P[pre + "wq"] = pg((DIM_S, DIM_S)); P[pre + "bq"] = pg((DIM_S,))
        P[pre + "wkv"] = pg((dkv, 2 * DIM_S)); P[pre + "bkv"] = pg((2 * DIM_S,))
        P[pre + "wo"] = pg((DIM_S, DIM_S)); P[pre + "bo"] = pg((DIM_S,))

    def attn_self(pre):                 # fused Q|K|V weights built at init
        P[pre + "wqkv"] = pg((DIM_S, 3 * DIM_S)); P[pre + "bqkv"] = pg((3 * DIM_S,))
        P[pre + "wo"] = pg((DIM_S, DIM_S)); P[pre + "bo"] = pg((DIM_S,))

    def mlp(pre, d):
        P[pre + "w1"] = pg((d, 4 * d)); P[pre + "b1"] = pg((4 * d,))
        P[pre + "w2"] = pg((4 * d, d)); P[pre + "b2"] = pg((d,))

    for i in range(4):
        pre = f"ch{i}_"                       # Channel_Based_CrossAttentionBlock
        ln(pre + "ln1q", DIM_S); ln(pre + "ln1kv", DIM_T)
        attn_cross(pre + "attn_", DIM_T); ln(pre + "ln2", DIM_S); mlp(pre + "mlp_", DIM_S)
        pre = f"cr{i}_"                       # CrossAttentionBlock
        ln(pre + "ln1q", DIM_S); ln(pre + "ln1kv", DIM_S)
        attn_cross(pre + "attn_", DIM_S); ln(pre + "ln2", DIM_S); mlp(pre + "mlp_", DIM_S)
        pre = f"sa{i}_"                       # Block (self attention)
        ln(pre + "ln1", DIM_S)
        attn_self(pre + "attn_"); ln(pre + "ln2", DIM_S); mlp(pre + "mlp_", DIM_S)

    # DPTHead (features=64, out_channels=[48,96,192,384])
    oc = [48, 96, 192, 384]
    feat = 64
    for i, c in enumerate(oc):
        P[f"proj{i}_w"] = pg((c, DIM_S, 1, 1)); P[f"proj{i}_b"] = pg((c,))
    P["resize0_w"] = pg((48, 48, 4, 4)); P["resize0_b"] = pg((48,))
    P["resize1_w"] = pg((96, 96, 2, 2)); P["resize1_b"] = pg((96,))
    P["resize3_w"] = pg((384, 384, 3, 3)); P["resize3_b"] = pg((384,))
    for i, c in enumerate(oc, start=1):
        P[f"l{i}rn_w"] = pg((feat, c, 3, 3))                 # bias=False in _make_scratch
    for r in ["ref1_", "ref2_", "ref3_", "ref4_"]:
        for u in ["rcu1_", "rcu2_"]:
            P[r + u + "c1w"] = pg((feat, feat, 3, 3)); P[r + u + "c1b"] = pg((feat,))
            P[r + u + "c2w"] = pg((feat, feat, 3, 3)); P[r + u + "c2b"] = pg((feat,))
        P[r + "ocw"] = pg((feat, feat, 1, 1)); P[r + "ocb"] = pg((feat,))
    P["oc1_w"] = pg((32, 64, 3, 3)); P["oc1_b"] = pg((32,))
    P["oc2a_w"] = pg((32, 32, 3, 3)); P["oc2a_b"] = pg((32,))
    P["oc2b_w"] = pg((1, 32, 1, 1)); P["oc2b_b"] = pg((1,))
    return P


# ----------------------------------------------------------------------------

if __name__ == "__main__":
    key = jax.random.PRNGKey(0)
    kx, kt, ks, kp = jax.random.split(key, 4)

    # --- spot-check the row-banded 3x3 conv against a pure-JAX reference -----
    kc = jax.random.fold_in(key, 7)
    xc = jax.random.normal(kc, (1, 20, 12, 8), jnp.float32)
    wc = 0.05 * jax.random.normal(jax.random.fold_in(kc, 1), (16, 8, 3, 3), jnp.float32)
    bc = 0.05 * jax.random.normal(jax.random.fold_in(kc, 2), (16,), jnp.float32)
    got = conv3x3_s1(xc, wc, bc, out_dtype=jnp.float32, band_rows=8)  # multi-band path
    ref = lax.conv_general_dilated(
        xc, wc.transpose(2, 3, 1, 0), (1, 1), "SAME",
        dimension_numbers=("NHWC", "HWIO", "NHWC")) + bc
    assert bool(jnp.allclose(got, ref, atol=3e-2, rtol=3e-2)), \
        float(jnp.max(jnp.abs(got - ref)))

    # --- full forward at small shapes ----------------------------------------
    B, h, w = 2, 28, 28                      # 14-multiple spatial size -> 2x2 patches
    patch_h, patch_w = h // 14, w // 14
    N = patch_h * patch_w

    x = jax.random.normal(kx, (B, 3, h, w), jnp.float32)
    # TODO(synk): DINOv2 intermediate features (4 layers each) supplied as inputs.
    teacher_features = [jax.random.normal(jax.random.fold_in(kt, i), (B, N, DIM_T),
                                          jnp.float32) for i in range(4)]
    student_features = [jax.random.normal(jax.random.fold_in(ks, i), (B, N, DIM_S),
                                          jnp.float32) for i in range(4)]

    params = init_params(kp)

    depth = asymkd_compress_forward(x, teacher_features, student_features, params,
                                    training=True)
    depth = jax.block_until_ready(depth)
    assert depth.shape == (B, 1, h, w), depth.shape
    assert bool(jnp.all(jnp.isfinite(depth)))
    print("KERNEL_OK")
</pallas_src>

<mosaic_0001>
module attributes {stable_mosaic.version = 11 : i64} {
  func.func @_conv3x3_kernel(%arg0: i32, %arg1: memref<1x266x8xbf16, #tpu.memory_space<vmem>>, %arg2: memref<72x16xbf16, #tpu.memory_space<vmem>>, %arg3: memref<1x16xf32, #tpu.memory_space<vmem>>, %arg4: memref<1x224x16xf32, #tpu.memory_space<vmem>>) attributes {dimension_semantics = [#tpu.dimension_semantics<parallel>], iteration_bounds = array<i64: 2>, scalar_prefetch = 0 : i64, scratch_operands = 0 : i64, tpu.core_type = #tpu.core_type<tc>, window_params = [{transform_indices = @transform_0, window_bounds = array<i64: 1, 266, 8>}, {pipeline_mode = #tpu.pipeline_mode<synchronous>, transform_indices = @transform_1, window_bounds = array<i64: 72, 16>}, {pipeline_mode = #tpu.pipeline_mode<synchronous>, transform_indices = @transform_2, window_bounds = array<i64: 1, 16>}, {transform_indices = @transform_3, window_bounds = array<i64: 1, 224, 16>}]} {
    %cst = arith.constant 0.000000e+00 : f32
    %0 = vector.broadcast %cst : f32 to vector<224x16xf32>
    %c0 = arith.constant 0 : index
    %c0_0 = arith.constant 0 : index
    %c0_1 = arith.constant 0 : index
    %1 = vector.load %arg1[%c0, %c0_0, %c0_1] : memref<1x266x8xbf16, #tpu.memory_space<vmem>>, vector<1x224x8xbf16>
    %2 = vector.shape_cast %1 : vector<1x224x8xbf16> to vector<224x8xbf16>
    %c0_2 = arith.constant 0 : index
    %c0_3 = arith.constant 0 : index
    %3 = vector.load %arg2[%c0_2, %c0_3] : memref<72x16xbf16, #tpu.memory_space<vmem>>, vector<8x16xbf16>
    %cst_4 = arith.constant dense<0.000000e+00> : vector<224x16xf32>
    %4 = tpu.matmul %2, %3, %cst_4 {dimension_numbers = #tpu.dot_dimension_numbers<[1], [0], [0], [1], [0, 0, 1, 1], [], []>} : vector<224x8xbf16>, vector<8x16xbf16>, vector<224x16xf32> -> vector<224x16xf32>
    %5 = arith.addf %0, %4 : vector<224x16xf32>
    %c0_5 = arith.constant 0 : index
    %c1 = arith.constant 1 : index
    %c0_6 = arith.constant 0 : index
    %6 = vector.load %arg1[%c0_5, %c1, %c0_6] : memref<1x266x8xbf16, #tpu.memory_space<vmem>>, vector<1x224x8xbf16>
    %7 = vector.shape_cast %6 : vector<1x224x8xbf16> to vector<224x8xbf16>
    %c8 = arith.constant 8 : index
    %c0_7 = arith.constant 0 : index
    %8 = vector.load %arg2[%c8, %c0_7] : memref<72x16xbf16, #tpu.memory_space<vmem>>, vector<8x16xbf16>
    %cst_8 = arith.constant dense<0.000000e+00> : vector<224x16xf32>
    %9 = tpu.matmul %7, %8, %cst_8 {dimension_numbers = #tpu.dot_dimension_numbers<[1], [0], [0], [1], [0, 0, 1, 1], [], []>} : vector<224x8xbf16>, vector<8x16xbf16>, vector<224x16xf32> -> vector<224x16xf32>
    %10 = arith.addf %5, %9 : vector<224x16xf32>
    %c0_9 = arith.constant 0 : index
    %c2 = arith.constant 2 : index
    %c0_10 = arith.constant 0 : index
    %11 = vector.load %arg1[%c0_9, %c2, %c0_10] : memref<1x266x8xbf16, #tpu.memory_space<vmem>>, vector<1x224x8xbf16>
    %12 = vector.shape_cast %11 : vector<1x224x8xbf16> to vector<224x8xbf16>
    %c16 = arith.constant 16 : index
    %c0_11 = arith.constant 0 : index
    %13 = vector.load %arg2[%c16, %c0_11] : memref<72x16xbf16, #tpu.memory_space<vmem>>, vector<8x16xbf16>
    %cst_12 = arith.constant dense<0.000000e+00> : vector<224x16xf32>
    %14 = tpu.matmul %12, %13, %cst_12 {dimension_numbers = #tpu.dot_dimension_numbers<[1], [0], [0], [1], [0, 0, 1, 1], [], []>} : vector<224x8xbf16>, vector<8x16xbf16>, vector<224x16xf32> -> vector<224x16xf32>
    %15 = arith.addf %10, %14 : vector<224x16xf32>
    %c0_13 = arith.constant 0 : index
    %c14 = arith.constant 14 : index
    %c0_14 = arith.constant 0 : index
    %16 = vector.load %arg1[%c0_13, %c14, %c0_14] : memref<1x266x8xbf16, #tpu.memory_space<vmem>>, vector<1x224x8xbf16>
    %17 = vector.shape_cast %16 : vector<1x224x8xbf16> to vector<224x8xbf16>
    %c24 = arith.constant 24 : index
    %c0_15 = arith.constant 0 : index
    %18 = vector.load %arg2[%c24, %c0_15] : memref<72x16xbf16, #tpu.memory_space<vmem>>, vector<8x16xbf16>
    %cst_16 = arith.constant dense<0.000000e+00> : vector<224x16xf32>
    %19 = tpu.matmul %17, %18, %cst_16 {dimension_numbers = #tpu.dot_dimension_numbers<[1], [0], [0], [1], [0, 0, 1, 1], [], []>} : vector<224x8xbf16>, vector<8x16xbf16>, vector<224x16xf32> -> vector<224x16xf32>
    %20 = arith.addf %15, %19 : vector<224x16xf32>
    %c0_17 = arith.constant 0 : index
    %c15 = arith.constant 15 : index
    %c0_18 = arith.constant 0 : index
    %21 = vector.load %arg1[%c0_17, %c15, %c0_18] : memref<1x266x8xbf16, #tpu.memory_space<vmem>>, vector<1x224x8xbf16>
    %22 = vector.shape_cast %21 : vector<1x224x8xbf16> to vector<224x8xbf16>
    %c32 = arith.constant 32 : index
    %c0_19 = arith.constant 0 : index
    %23 = vector.load %arg2[%c32, %c0_19] : memref<72x16xbf16, #tpu.memory_space<vmem>>, vector<8x16xbf16>
    %cst_20 = arith.constant dense<0.000000e+00> : vector<224x16xf32>
    %24 = tpu.matmul %22, %23, %cst_20 {dimension_numbers = #tpu.dot_dimension_numbers<[1], [0], [0], [1], [0, 0, 1, 1], [], []>} : vector<224x8xbf16>, vector<8x16xbf16>, vector<224x16xf32> -> vector<224x16xf32>
    %25 = arith.addf %20, %24 : vector<224x16xf32>
    %c0_21 = arith.constant 0 : index
    %c16_22 = arith.constant 16 : index
    %c0_23 = arith.constant 0 : index
    %26 = vector.load %arg1[%c0_21, %c16_22, %c0_23] : memref<1x266x8xbf16, #tpu.memory_space<vmem>>, vector<1x224x8xbf16>
    %27 = vector.shape_cast %26 : vector<1x224x8xbf16> to vector<224x8xbf16>
    %c40 = arith.constant 40 : index
    %c0_24 = arith.constant 0 : index
    %28 = vector.load %arg2[%c40, %c0_24] : memref<72x16xbf16, #tpu.memory_space<vmem>>, vector<8x16xbf16>
    %cst_25 = arith.constant dense<0.000000e+00> : vector<224x16xf32>
    %29 = tpu.matmul %27, %28, %cst_25 {dimension_numbers = #tpu.dot_dimension_numbers<[1], [0], [0], [1], [0, 0, 1, 1], [], []>} : vector<224x8xbf16>, vector<8x16xbf16>, vector<224x16xf32> -> vector<224x16xf32>
    %30 = arith.addf %25, %29 : vector<224x16xf32>
    %c0_26 = arith.constant 0 : index
    %c28 = arith.constant 28 : index
    %c0_27 = arith.constant 0 : index
    %31 = vector.load %arg1[%c0_26, %c28, %c0_27] : memref<1x266x8xbf16, #tpu.memory_space<vmem>>, vector<1x224x8xbf16>
    %32 = vector.shape_cast %31 : vector<1x224x8xbf16> to vector<224x8xbf16>
    %c48 = arith.constant 48 : index
    %c0_28 = arith.constant 0 : index
    %33 = vector.load %arg2[%c48, %c0_28] : memref<72x16xbf16, #tpu.memory_space<vmem>>, vector<8x16xbf16>
    %cst_29 = arith.constant dense<0.000000e+00> : vector<224x16xf32>
    %34 = tpu.matmul %32, %33, %cst_29 {dimension_numbers = #tpu.dot_dimension_numbers<[1], [0], [0], [1], [0, 0, 1, 1], [], []>} : vector<224x8xbf16>, vector<8x16xbf16>, vector<224x16xf32> -> vector<224x16xf32>
    %35 = arith.addf %30, %34 : vector<224x16xf32>
    %c0_30 = arith.constant 0 : index
    %c29 = arith.constant 29 : index
    %c0_31 = arith.constant 0 : index
    %36 = vector.load %arg1[%c0_30, %c29, %c0_31] : memref<1x266x8xbf16, #tpu.memory_space<vmem>>, vector<1x224x8xbf16>
    %37 = vector.shape_cast %36 : vector<1x224x8xbf16> to vector<224x8xbf16>
    %c56 = arith.constant 56 : index
    %c0_32 = arith.constant 0 : index
    %38 = vector.load %arg2[%c56, %c0_32] : memref<72x16xbf16, #tpu.memory_space<vmem>>, vector<8x16xbf16>
    %cst_33 = arith.constant dense<0.000000e+00> : vector<224x16xf32>
    %39 = tpu.matmul %37, %38, %cst_33 {dimension_numbers = #tpu.dot_dimension_numbers<[1], [0], [0], [1], [0, 0, 1, 1], [], []>} : vector<224x8xbf16>, vector<8x16xbf16>, vector<224x16xf32> -> vector<224x16xf32>
    %40 = arith.addf %35, %39 : vector<224x16xf32>
    %c0_34 = arith.constant 0 : index
    %c30 = arith.constant 30 : index
    %c0_35 = arith.constant 0 : index
    %41 = vector.load %arg1[%c0_34, %c30, %c0_35] : memref<1x266x8xbf16, #tpu.memory_space<vmem>>, vector<1x224x8xbf16>
    %42 = vector.shape_cast %41 : vector<1x224x8xbf16> to vector<224x8xbf16>
    %c64 = arith.constant 64 : index
    %c0_36 = arith.constant 0 : index
    %43 = vector.load %arg2[%c64, %c0_36] : memref<72x16xbf16, #tpu.memory_space<vmem>>, vector<8x16xbf16>
    %cst_37 = arith.constant dense<0.000000e+00> : vector<224x16xf32>
    %44 = tpu.matmul %42, %43, %cst_37 {dimension_numbers = #tpu.dot_dimension_numbers<[1], [0], [0], [1], [0, 0, 1, 1], [], []>} : vector<224x8xbf16>, vector<8x16xbf16>, vector<224x16xf32> -> vector<224x16xf32>
    %45 = arith.addf %40, %44 : vector<224x16xf32>
    %c0_38 = arith.constant 0 : index
    %c0_39 = arith.constant 0 : index
    %46 = vector.load %arg3[%c0_38, %c0_39] : memref<1x16xf32, #tpu.memory_space<vmem>>, vector<1x16xf32>
    %47 = vector.broadcast %46 : vector<1x16xf32> to vector<224x16xf32>
    %48 = arith.addf %45, %47 : vector<224x16xf32>
    %c0_40 = arith.constant 0 : index
    %c0_41 = arith.constant 0 : index
    %c0_42 = arith.constant 0 : index
    %49 = vector.load %arg4[%c0_40, %c0_41, %c0_42] : memref<1x224x16xf32, #tpu.memory_space<vmem>>, vector<1x224x16xf32>
    %50 = vector.shape_cast %49 : vector<1x224x16xf32> to vector<224x16xf32>
    %51 = vector.shape_cast %48 : vector<224x16xf32> to vector<1x224x16xf32>
    tpu.vector_store %arg4[%c0_40, %c0_41, %c0_42], %51 {strides = array<i32>} : memref<1x224x16xf32, #tpu.memory_space<vmem>>, vector<1x224x16xf32>,
    return
  }
  func.func @transform_0(%arg0: i32) -> (i32, i32, i32) {
    %c0_i32 = arith.constant 0 : i32
    %c0_i32_0 = arith.constant 0 : i32
    %c0_i32_1 = arith.constant 0 : i32
    return %arg0, %c0_i32, %c0_i32_0 : i32, i32, i32
  }
  func.func @transform_1(%arg0: i32) -> (i32, i32) {
    %c0_i32 = arith.constant 0 : i32
    %c0_i32_0 = arith.constant 0 : i32
    %c0_i32_1 = arith.constant 0 : i32
    return %c0_i32, %c0_i32_0 : i32, i32
  }
  func.func @transform_2(%arg0: i32) -> (i32, i32) {
    %c0_i32 = arith.constant 0 : i32
    %c0_i32_0 = arith.constant 0 : i32
    %c0_i32_1 = arith.constant 0 : i32
    return %c0_i32, %c0_i32_0 : i32, i32
  }
  func.func @transform_3(%arg0: i32) -> (i32, i32, i32) {
    %c0_i32 = arith.constant 0 : i32
    %c0_i32_0 = arith.constant 0 : i32
    %c0_i32_1 = arith.constant 0 : i32
    return %arg0, %c0_i32, %c0_i32_0 : i32, i32, i32
  }
}

</mosaic_0001>

<llo_original>
// kernel: tpu_custom_call.1
$region0: #{tpu_custom_call.1}
  #allocation0 [shape = 'u32[]', space=smem, size = 0x4, offset = 0x4, fixed_abs, tag = 'smem constant byte address 0x4 - core index']
  #allocation1 [shape = 'u32[72,128]{1,0:T(1,128)}', space=vmem, size = 0x9000, scoped, tag = 'internal scratch']
  %s0 = inlined_call_operand.vmem [shape: bf16[2,266,8], index: 0, kind: input, shape index: {}]
  %s1 = inlined_call_operand.vmem [shape: bf16[72,16], index: 1, kind: input, shape index: {}]
  %s2 = inlined_call_operand.vmem [shape: f32[1,16], index: 2, kind: input, shape index: {}]
  %s3 = inlined_call_operand.vmem [shape: f32[2,224,16], index: 3, kind: output, shape index: {}]
  %s4 = sld [smem:[#allocation0]]
  $region45: #{tpu_custom_call.1} parent=0
    _
  %s6 = ssub.s32 1, %s4
  %s7 = scalar_select 0, %s6, %s4
  loop: start=0, step=1, limit=4
  $region2: #{tpu_custom_call.1} parent=0 // loop_pre_header
    _
  $region3: #{tpu_custom_call.1} parent=0 // loop_header
    %s9 = sphi 0, %s13
    %p10 = scmp.ge.s32.totalorder %s9, 4
    %s19 = sphi 0, %s21
    %s22 = sphi 0, %s19
    %s23 = sphi 0, %s22
    %s39 = sphi 0, %s23
    %s43 = sphi 0, %s43
    %s45 = sphi 0, %s43
    %s46 = sphi 0, %s45
    %s60 = sphi 0, %s46
    %s64 = sphi 0, %s64
    %s66 = sphi 0, %s64
    %s67 = sphi 0, %s66
    %s81 = sphi 0, %s67
    %s87 = sphi 0, %s89
    %s90 = sphi 0, %s87
    %s91 = sphi 0, %s90
    %s107 = sphi 0, %s91
  $region4: #{tpu_custom_call.1} parent=0 // loop_header_branch
    %12 = sbr.rel (%p10) target = $region8
  $region5: #{tpu_custom_call.1} parent=0 // loop_body
    %s14 = ssub.s32 %s9, 1
    %s15 = ssub.s32 %s9, 2
    %s16 = sadd.s32 %s9, 1
    %s17 = ssub.s32 %s9, %s16
    %p18 = scmp.eq.s32.totalorder %s17, 0
    %s20 = sadd.s32 %s19, 1
    %s21 = scalar_select %p18, %s19, %s20
    %p24 = pneg %p18
    %p25 = scmp.eq.s32.totalorder %s9, 1
    %p26 = por %p24, %p25
    %p27 = scmp.ne.s32.totalorder %s19, %s22
    %p28 = scmp.eq.s32.totalorder %s9, 0
    %p29 = por %p27, %p28
    %p30 = scmp.ne.s32.totalorder %s19, %s22
    %p31 = scmp.eq.s32.totalorder %s14, 1
    %p32 = por %p30, %p31
    %p33 = scmp.ne.s32.totalorder %s22, %s23
    %p34 = scmp.eq.s32.totalorder %s14, 0
    %p35 = por %p33, %p34
    %p36 = scmp.ne.s32.totalorder %s22, %s23
    %p37 = scmp.eq.s32.totalorder %s15, 1
    %p38 = por %p36, %p37
    %p40 = scmp.ne.s32.totalorder %s23, %s39
    %p41 = scmp.eq.s32.totalorder %s15, 0
    %p42 = por %p40, %p41
    %s44 = sadd.s32 %s43, 1
    %p47 = scmp.eq.s32.totalorder %s9, 1
    %p48 = scmp.ne.s32.totalorder %s43, %s45
    %p49 = scmp.eq.s32.totalorder %s9, 0
    %p50 = por %p48, %p49
    %p51 = scmp.ne.s32.totalorder %s43, %s45
    %p52 = scmp.eq.s32.totalorder %s14, 1
    %p53 = por %p51, %p52
    %p54 = scmp.ne.s32.totalorder %s45, %s46
    %p55 = scmp.eq.s32.totalorder %s14, 0
    %p56 = por %p54, %p55
    %p57 = scmp.ne.s32.totalorder %s45, %s46
    %p58 = scmp.eq.s32.totalorder %s15, 1
    %p59 = por %p57, %p58
    %p61 = scmp.ne.s32.totalorder %s46, %s60
    %p62 = scmp.eq.s32.totalorder %s15, 0
    %p63 = por %p61, %p62
    %s65 = sadd.s32 %s64, 1
    %p68 = scmp.eq.s32.totalorder %s9, 1
    %p69 = scmp.ne.s32.totalorder %s64, %s66
    %p70 = scmp.eq.s32.totalorder %s9, 0
    %p71 = por %p69, %p70
    %p72 = scmp.ne.s32.totalorder %s64, %s66
    %p73 = scmp.eq.s32.totalorder %s14, 1
    %p74 = por %p72, %p73
    %p75 = scmp.ne.s32.totalorder %s66, %s67
    %p76 = scmp.eq.s32.totalorder %s14, 0
    %p77 = por %p75, %p76
    %p78 = scmp.ne.s32.totalorder %s66, %s67
    %p79 = scmp.eq.s32.totalorder %s15, 1
    %p80 = por %p78, %p79
    %p82 = scmp.ne.s32.totalorder %s67, %s81
    %p83 = scmp.eq.s32.totalorder %s15, 0
    %p84 = por %p82, %p83
    %s85 = ssub.s32 %s9, %s16
    %p86 = scmp.eq.s32.totalorder %s85, 0
    %s88 = sadd.s32 %s87, 1
    %s89 = scalar_select %p86, %s87, %s88
    %p92 = pneg %p86
    %p93 = scmp.eq.s32.totalorder %s9, 1
    %p94 = por %p92, %p93
    %p95 = scmp.ne.s32.totalorder %s87, %s90
    %p96 = scmp.eq.s32.totalorder %s9, 0
    %p97 = por %p95, %p96
    %p98 = scmp.ne.s32.totalorder %s87, %s90
    %p99 = scmp.eq.s32.totalorder %s14, 1
    %p100 = por %p98, %p99
    %p101 = scmp.ne.s32.totalorder %s90, %s91
    %p102 = scmp.eq.s32.totalorder %s14, 0
    %p103 = por %p101, %p102
    %p104 = scmp.ne.s32.totalorder %s90, %s91
    %p105 = scmp.eq.s32.totalorder %s15, 1
    %p106 = por %p104, %p105
    %p108 = scmp.ne.s32.totalorder %s91, %s107
    %p109 = scmp.eq.s32.totalorder %s15, 0
    %p110 = por %p108, %p109
    %p111 = scmp.le.s32.totalorder 1, %s9
    %p112 = scmp.lt.s32.totalorder %s9, 3
    %p113 = pnand %p111, %p112
    %p114 = pneg %p113
    // Predicated region
    $region9: #{tpu_custom_call.1} parent=5 // pred_check
      _
    $region10: #{tpu_custom_call.1} parent=5 // pred_check_branch
      %116 = sbr.rel (%p113) target = $region12
    $region11: #{tpu_custom_call.1} parent=5 // pred_region
      %s117 = ssub.s32 %s9, 1
      // Predicated region
      $region13: #{tpu_custom_call.1} parent=11 // pred_check
        %p118 = pneg %p56
      $region14: #{tpu_custom_call.1} parent=11 // pred_check_branch
        %120 = sbr.rel (%p118) target = $region16
      $region15: #{tpu_custom_call.1} parent=11 // pred_region
        _
      $region16: #{tpu_custom_call.1} parent=11 // pred_fallthru
        _
      // Predicated region
      $region17: #{tpu_custom_call.1} parent=11 // pred_check
        %p121 = pneg %p77
      $region18: #{tpu_custom_call.1} parent=11 // pred_check_branch
        %123 = sbr.rel (%p121) target = $region20
      $region19: #{tpu_custom_call.1} parent=11 // pred_region
        _
      $region20: #{tpu_custom_call.1} parent=11 // pred_fallthru
        _
    $region12: #{tpu_custom_call.1} parent=5 // pred_fallthru
      _
    %p124 = scmp.lt.s32.totalorder %s9, 2
    // Predicated region
    $region21: #{tpu_custom_call.1} parent=5 // pred_check
      %p125 = pneg %p124
    $region22: #{tpu_custom_call.1} parent=5 // pred_check_branch
      %127 = sbr.rel (%p125) target = $region24
    $region23: #{tpu_custom_call.1} parent=5 // pred_region
      // Predicated region
      $region25: #{tpu_custom_call.1} parent=23 // pred_check
        %p128 = pneg %p29
      $region26: #{tpu_custom_call.1} parent=23 // pred_check_branch
        %130 = sbr.rel (%p128) target = $region28
      $region27: #{tpu_custom_call.1} parent=23 // pred_region
        %p131 = scmp.lt.s32.totalorder %s9, 1
        %s132 = scalar_select %p131, %s9, 1
        %s133 = smul.addr %s132, 34
        %s134 = smul.addr %s133, 4
        %s135 = scalar_lea.vmem %s0, %s134
      $region28: #{tpu_custom_call.1} parent=23 // pred_fallthru
        _
    $region24: #{tpu_custom_call.1} parent=5 // pred_fallthru
      _
    %p136 = scmp.le.s32.totalorder 1, %s9
    %p137 = scmp.lt.s32.totalorder %s9, 3
    %p138 = pnand %p136, %p137
    %p139 = pneg %p138
    // Predicated region
    $region29: #{tpu_custom_call.1} parent=5 // pred_check
      _
    $region30: #{tpu_custom_call.1} parent=5 // pred_check_branch
      %141 = sbr.rel (%p138) target = $region32
    $region31: #{tpu_custom_call.1} parent=5 // pred_region
      %s142 = ssub.s32 %s9, 1
      %p143 = scmp.lt.s32.totalorder %s14, 1
      %s144 = scalar_select %p143, %s14, 1
      %s145 = smul.addr %s144, 34
      %s146 = smul.addr %s145, 4
      %s147 = scalar_lea.vmem %s0, %s146
      %p148 = pneg %p35
      %p149 = pneg %p32
      %p150 = pneg %p56
      %p151 = pneg %p53
      %p152 = pneg %p77
      %p153 = pneg %p74
      %p154 = pneg %p103
      %p155 = pneg %p100
      %p156 = scmp.lt.s32.totalorder %s14, 1
      %s157 = scalar_select %p156, %s14, 1
      %s158 = smul.addr %s157, 28
      %s159 = smul.addr %s158, 8
      %s160 = scalar_lea.vmem %s3, %s159
      %p161 = scmp.lt.s32.totalorder %s14, 1
      %s162 = scalar_select %p161, %s14, 1
      %s163 = smul.addr %s162, 34
      %s164 = smul.addr %s163, 4
      %s165 = scalar_lea.vmem %s0, %s164
      %p166 = scmp.lt.s32.totalorder %s14, 1
      %s167 = scalar_select %p166, %s14, 1
      %s168 = smul.addr %s167, 28
      %s169 = smul.addr %s168, 8
      %s170 = scalar_lea.vmem %s3, %s169
      %v172 = vld [vmem:[%s165] sm:$0xf]
      %v173 = vld [vmem:[%s165 + $0x4] sm:$0xf]
      %v174 = vld [vmem:[%s165 + $0x8] sm:$0xf]
      %v175 = vld [vmem:[%s165 + $0xc] sm:$0xf]
      %v176 = vld [vmem:[%s165 + $0x10] sm:$0xf]
      %v177 = vld [vmem:[%s165 + $0x14] sm:$0xf]
      %v178 = vld [vmem:[%s165 + $0x18] sm:$0xf]
      %v179 = vld [vmem:[%s165 + $0x1c] sm:$0xf]
      %v180 = vld [vmem:[%s165 + $0x20] sm:$0xf]
      %v181 = vld [vmem:[%s165 + $0x24] sm:$0xf]
      %v182 = vld [vmem:[%s165 + $0x28] sm:$0xf]
      %v183 = vld [vmem:[%s165 + $0x2c] sm:$0xf]
      %v184 = vld [vmem:[%s165 + $0x30] sm:$0xf]
      %v185 = vld [vmem:[%s165 + $0x34] sm:$0xf]
      %v186 = vld [vmem:[%s165 + $0x38] sm:$0xf]
      %v187 = vld [vmem:[%s165 + $0x3c] sm:$0xf]
      %v188 = vld [vmem:[%s165 + $0x40] sm:$0xf]
      %v189 = vld [vmem:[%s165 + $0x44] sm:$0xf]
      %v190 = vld [vmem:[%s165 + $0x48] sm:$0xf]
      %v191 = vld [vmem:[%s165 + $0x4c] sm:$0xf]
      %v192 = vld [vmem:[%s165 + $0x50] sm:$0xf]
      %v193 = vld [vmem:[%s165 + $0x54] sm:$0xf]
      %v194 = vld [vmem:[%s165 + $0x58] sm:$0xf]
      %v195 = vld [vmem:[%s165 + $0x5c] sm:$0xf]
      %v196 = vld [vmem:[%s165 + $0x60] sm:$0xf]
      %v197 = vld [vmem:[%s165 + $0x64] sm:$0xf]
      %v198 = vld [vmem:[%s165 + $0x68] sm:$0xf]
      %v199 = vld [vmem:[%s165 + $0x6c] sm:$0xf]
      %v200 = vld [vmem:[%s1] sm:$0xf]
      %v201 = vld [vmem:[%s165 + $0x70] sm:$0x1]
      %v202 = vld [vmem:[%s1 + $0x4] sm:$0xf]
      %v232 = vunpack.c.l.b16 %v172
      %v233 = vunpack.c.l.b16 %v173
      %v234 = vunpack.c.l.b16 %v174
      %v235 = vunpack.c.l.b16 %v175
      %v236 = vunpack.c.l.b16 %v176
      %v237 = vunpack.c.l.b16 %v177
      %v238 = vunpack.c.l.b16 %v178
      %v239 = vunpack.c.l.b16 %v179
      %v240 = vunpack.c.l.b16 %v180
      %v241 = vunpack.c.l.b16 %v181
      %v242 = vunpack.c.l.b16 %v182
      %v243 = vunpack.c.l.b16 %v183
      %v244 = vunpack.c.l.b16 %v184
      %v245 = vunpack.c.l.b16 %v185
      %v246 = vunpack.c.l.b16 %v186
      %v247 = vunpack.c.l.b16 %v187
      %v248 = vunpack.c.l.b16 %v188
      %v249 = vunpack.c.l.b16 %v189
      %v250 = vunpack.c.l.b16 %v190
      %v251 = vunpack.c.l.b16 %v191
      %v252 = vunpack.c.l.b16 %v192
      %v253 = vunpack.c.l.b16 %v193
      %v254 = vunpack.c.l.b16 %v194
      %v255 = vunpack.c.l.b16 %v195
      %v256 = vunpack.c.l.b16 %v196
      %v257 = vunpack.c.l.b16 %v197
      %v258 = vunpack.c.l.b16 %v198
      %v259 = vunpack.c.l.b16 %v199
      %v260 = vunpack.c.l.b16 %v201
      %v261 = vpack.c.b16 %v233, %v232
      %v262 = vpack.c.b16 %v235, %v234
      %v263 = vpack.c.b16 %v237, %v236
      %v264 = vpack.c.b16 %v239, %v238
      %v265 = vpack.c.b16 %v241, %v240
      %v266 = vpack.c.b16 %v243, %v242
      %v267 = vpack.c.b16 %v245, %v244
      %v268 = vpack.c.b16 %v247, %v246
      %v269 = vpack.c.b16 %v249, %v248
      %v270 = vpack.c.b16 %v251, %v250
      %v271 = vpack.c.b16 %v253, %v252
      %v272 = vpack.c.b16 %v255, %v254
      %v273 = vpack.c.b16 %v257, %v256
      %v274 = vpack.c.b16 %v259, %v258
      %v275 = vpack.c.b16 %v260, %v260
      %vm276 = vsmask.f32 7424
      %v278 = vshrl.u32 %v261, 16
      %v280 = vshll.u32 %v261, 16
      %v282 = vrot.slane %v280, 1
      %v283 = vor.u32 %v278, %v282
      %v285 = vshll.u32 %v262, 16
      %v287 = vrot.slane %v285, 1
      %v288 = vsel %vm276, %v283, %v287
      %v289 = vshrl.u32 %v262, 16
      %v291 = vor.u32 %v289, %v287
      %v293 = vshll.u32 %v263, 16
      %v295 = vrot.slane %v293, 1
      %v296 = vsel %vm276, %v291, %v295
      %v297 = vshrl.u32 %v263, 16
      %v299 = vor.u32 %v297, %v295
      %v301 = vshll.u32 %v264, 16
      %v303 = vrot.slane %v301, 1
      %v304 = vsel %vm276, %v299, %v303
      %v305 = vshrl.u32 %v264, 16
      %v307 = vor.u32 %v305, %v303
      %v309 = vshll.u32 %v265, 16
      %v311 = vrot.slane %v309, 1
      %v312 = vsel %vm276, %v307, %v311
      %v313 = vshrl.u32 %v265, 16
      %v315 = vor.u32 %v313, %v311
      %v317 = vshll.u32 %v266, 16
      %v319 = vrot.slane %v317, 1
      %v320 = vsel %vm276, %v315, %v319
      %v321 = vshrl.u32 %v266, 16
      %v323 = vor.u32 %v321, %v319
      %v325 = vshll.u32 %v267, 16
      %v327 = vrot.slane %v325, 1
      %v328 = vsel %vm276, %v323, %v327
      %v329 = vshrl.u32 %v267, 16
      %v331 = vor.u32 %v329, %v327
      %v333 = vshll.u32 %v268, 16
      %v335 = vrot.slane %v333, 1
      %v336 = vsel %vm276, %v331, %v335
      %v337 = vshrl.u32 %v268, 16
      %v339 = vor.u32 %v337, %v335
      %v341 = vshll.u32 %v269, 16
      %v343 = vrot.slane %v341, 1
      %v344 = vsel %vm276, %v339, %v343
      %v345 = vshrl.u32 %v269, 16
      %v347 = vor.u32 %v345, %v343
      %v349 = vshll.u32 %v270, 16
      %v351 = vrot.slane %v349, 1
      %v352 = vsel %vm276, %v347, %v351
      %v353 = vshrl.u32 %v270, 16
      %v355 = vor.u32 %v353, %v351
      %v357 = vshll.u32 %v271, 16
      %v359 = vrot.slane %v357, 1
      %v360 = vsel %vm276, %v355, %v359
      %v361 = vshrl.u32 %v271, 16
      %v363 = vor.u32 %v361, %v359
      %v365 = vshll.u32 %v272, 16
      %v367 = vrot.slane %v365, 1
      %v368 = vsel %vm276, %v363, %v367
      %v369 = vshrl.u32 %v272, 16
      %v371 = vor.u32 %v369, %v367
      %v373 = vshll.u32 %v273, 16
      %v375 = vrot.slane %v373, 1
      %v376 = vsel %vm276, %v371, %v375
      %v377 = vshrl.u32 %v273, 16
      %v379 = vor.u32 %v377, %v375
      %v381 = vshll.u32 %v274, 16
      %v383 = vrot.slane %v381, 1
      %v384 = vsel %vm276, %v379, %v383
      %v385 = vshrl.u32 %v274, 16
      %v387 = vor.u32 %v385, %v383
      %v389 = vshll.u32 %v275, 16
      %v391 = vrot.slane %v389, 1
      %v392 = vsel %vm276, %v387, %v391
      %vm393 = vcmask 64512
      %v395 = vsel %vm393, %v288, 0
      %v398 = vsel %vm393, %v296, 0
      %v401 = vsel %vm393, %v304, 0
      %v404 = vsel %vm393, %v312, 0
      %v407 = vsel %vm393, %v320, 0
      %v410 = vsel %vm393, %v328, 0
      %v413 = vsel %vm393, %v336, 0
      %v416 = vsel %vm393, %v344, 0
      %v419 = vsel %vm393, %v352, 0
      %v422 = vsel %vm393, %v360, 0
      %v425 = vsel %vm393, %v368, 0
      %v428 = vsel %vm393, %v376, 0
      %v431 = vsel %vm393, %v384, 0
      %v434 = vsel %vm393, %v392, 0
      %vm436 = vcmask 1043456
      %v438 = vsel %vm436, %v202, 0
      %440 = vmatpush.bf16.msra.mxu0 0
      %441 = vmatpush.bf16.msra.mxu0 0
      %442 = vmatpush.bf16.msra.mxu0 0
      %443 = vmatpush.bf16.msra.mxu0 0
      %444 = vmatpush.bf16.msra.mxu0 0
      %445 = vmatpush.bf16.msra.mxu0 0
      %446 = vmatpush.bf16.msra.mxu0 0
      %447 = vmatpush.bf16.msra.mxu0 %v438
      %448 = vmatmul.bf16.gmra.mxu0 %v395
      %v449 = vpop.f32.mrf.mxu0
      %v450 = vadd.f32 0.0, %v449
      %v451 = vpop.f32.mrf.mxu0
      %v452 = vadd.f32 0.0, %v451
      %453 = vmatmul.bf16.gmra.mxu0 %v398
      %v454 = vpop.f32.mrf.mxu0
      %v455 = vadd.f32 0.0, %v454
      %v456 = vpop.f32.mrf.mxu0
      %v457 = vadd.f32 0.0, %v456
      %458 = vmatmul.bf16.gmra.mxu0 %v401
      %v459 = vpop.f32.mrf.mxu0
      %v460 = vadd.f32 0.0, %v459
      %v461 = vpop.f32.mrf.mxu0
      %v462 = vadd.f32 0.0, %v461
      %463 = vmatmul.bf16.gmra.mxu0 %v404
      %v464 = vpop.f32.mrf.mxu0
      %v465 = vadd.f32 0.0, %v464
      %v466 = vpop.f32.mrf.mxu0
      %v467 = vadd.f32 0.0, %v466
      %468 = vmatmul.bf16.gmra.mxu0 %v407
      %v469 = vpop.f32.mrf.mxu0
      %v470 = vadd.f32 0.0, %v469
      %v471 = vpop.f32.mrf.mxu0
      %v472 = vadd.f32 0.0, %v471
      %473 = vmatmul.bf16.gmra.mxu0 %v410
      %v474 = vpop.f32.mrf.mxu0
      %v475 = vadd.f32 0.0, %v474
      %v476 = vpop.f32.mrf.mxu0
      %v477 = vadd.f32 0.0, %v476
      %478 = vmatmul.bf16.gmra.mxu0 %v413
      %v479 = vpop.f32.mrf.mxu0
      %v480 = vadd.f32 0.0, %v479
      %v481 = vpop.f32.mrf.mxu0
      %v482 = vadd.f32 0.0, %v481
      %483 = vmatmul.bf16.gmra.mxu0 %v416
      %v484 = vpop.f32.mrf.mxu0
      %v485 = vadd.f32 0.0, %v484
      %v486 = vpop.f32.mrf.mxu0
      %v487 = vadd.f32 0.0, %v486
      %488 = vmatmul.bf16.gmra.mxu0 %v419
      %v489 = vpop.f32.mrf.mxu0
      %v490 = vadd.f32 0.0, %v489
      %v491 = vpop.f32.mrf.mxu0
      %v492 = vadd.f32 0.0, %v491
      %493 = vmatmul.bf16.gmra.mxu0 %v422
      %v494 = vpop.f32.mrf.mxu0
      %v495 = vadd.f32 0.0, %v494
      %v496 = vpop.f32.mrf.mxu0
      %v497 = vadd.f32 0.0, %v496
      %498 = vmatmul.bf16.gmra.mxu0 %v425
      %v499 = vpop.f32.mrf.mxu0
      %v500 = vadd.f32 0.0, %v499
      %v501 = vpop.f32.mrf.mxu0
      %v502 = vadd.f32 0.0, %v501
      %503 = vmatmul.bf16.gmra.mxu0 %v428
      %v504 = vpop.f32.mrf.mxu0
      %v505 = vadd.f32 0.0, %v504
      %v506 = vpop.f32.mrf.mxu0
      %v507 = vadd.f32 0.0, %v506
      %508 = vmatmul.bf16.gmra.mxu0 %v431
      %v509 = vpop.f32.mrf.mxu0
      %v510 = vadd.f32 0.0, %v509
      %v511 = vpop.f32.mrf.mxu0
      %v512 = vadd.f32 0.0, %v511
      %513 = vmatmul.bf16.gmra.mxu0 %v434
      %v514 = vpop.f32.mrf.mxu0
      %v515 = vadd.f32 0.0, %v514
      %v516 = vpop.f32.mrf.mxu0
      %v517 = vadd.f32 0.0, %v516
      %518 = vdwg.mxu0
      %v519 = vsel %vm393, %v261, 0
      %v521 = vsel %vm393, %v262, 0
      %v523 = vsel %vm393, %v263, 0
      %v525 = vsel %vm393, %v264, 0
      %v527 = vsel %vm393, %v265, 0
      %v529 = vsel %vm393, %v266, 0
      %v531 = vsel %vm393, %v267, 0
      %v533 = vsel %vm393, %v268, 0
      %v535 = vsel %vm393, %v269, 0
      %v537 = vsel %vm393, %v270, 0
      %v539 = vsel %vm393, %v271, 0
      %v541 = vsel %vm393, %v272, 0
      %v543 = vsel %vm393, %v273, 0
      %v545 = vsel %vm393, %v274, 0
      %v548 = vsel %vm436, %v200, 0
      %550 = vmatpush.bf16.msra.mxu0 0
      %551 = vmatpush.bf16.msra.mxu0 0
      %552 = vmatpush.bf16.msra.mxu0 0
      %553 = vmatpush.bf16.msra.mxu0 0
      %554 = vmatpush.bf16.msra.mxu0 0
      %555 = vmatpush.bf16.msra.mxu0 0
      %556 = vmatpush.bf16.msra.mxu0 0
      %557 = vmatpush.bf16.msra.mxu0 %v548
      %558 = vmatmul.bf16.gmra.mxu0 %v519
      %v559 = vpop.f32.mrf.mxu0
      %v560 = vadd.f32 %v450, %v559
      %v561 = vpop.f32.mrf.mxu0
      %v562 = vadd.f32 %v452, %v561
      %563 = vmatmul.bf16.gmra.mxu0 %v521
      %v564 = vpop.f32.mrf.mxu0
      %v565 = vadd.f32 %v455, %v564
      %v566 = vpop.f32.mrf.mxu0
      %v567 = vadd.f32 %v457, %v566
      %568 = vmatmul.bf16.gmra.mxu0 %v523
      %v569 = vpop.f32.mrf.mxu0
      %v570 = vadd.f32 %v460, %v569
      %v571 = vpop.f32.mrf.mxu0
      %v572 = vadd.f32 %v462, %v571
      %573 = vmatmul.bf16.gmra.mxu0 %v525
      %v574 = vpop.f32.mrf.mxu0
      %v575 = vadd.f32 %v465, %v574
      %v576 = vpop.f32.mrf.mxu0
      %v577 = vadd.f32 %v467, %v576
      %578 = vmatmul.bf16.gmra.mxu0 %v527
      %v579 = vpop.f32.mrf.mxu0
      %v580 = vadd.f32 %v470, %v579
      %v581 = vpop.f32.mrf.mxu0
      %v582 = vadd.f32 %v472, %v581
      %583 = vmatmul.bf16.gmra.mxu0 %v529
      %v584 = vpop.f32.mrf.mxu0
      %v585 = vadd.f32 %v475, %v584
      %v586 = vpop.f32.mrf.mxu0
      %v587 = vadd.f32 %v477, %v586
      %588 = vmatmul.bf16.gmra.mxu0 %v531
      %v589 = vpop.f32.mrf.mxu0
      %v590 = vadd.f32 %v480, %v589
      %v591 = vpop.f32.mrf.mxu0
      %v592 = vadd.f32 %v482, %v591
      %593 = vmatmul.bf16.gmra.mxu0 %v533
      %v594 = vpop.f32.mrf.mxu0
      %v595 = vadd.f32 %v485, %v594
      %v596 = vpop.f32.mrf.mxu0
      %v597 = vadd.f32 %v487, %v596
      %598 = vmatmul.bf16.gmra.mxu0 %v535
      %v599 = vpop.f32.mrf.mxu0
      %v600 = vadd.f32 %v490, %v599
      %v601 = vpop.f32.mrf.mxu0
      %v602 = vadd.f32 %v492, %v601
      %603 = vmatmul.bf16.gmra.mxu0 %v537
      %v604 = vpop.f32.mrf.mxu0
      %v605 = vadd.f32 %v495, %v604
      %v606 = vpop.f32.mrf.mxu0
      %v607 = vadd.f32 %v497, %v606
      %608 = vmatmul.bf16.gmra.mxu0 %v539
      %v609 = vpop.f32.mrf.mxu0
      %v610 = vadd.f32 %v500, %v609
      %v611 = vpop.f32.mrf.mxu0
      %v612 = vadd.f32 %v502, %v611
      %613 = vmatmul.bf16.gmra.mxu0 %v541
      %v614 = vpop.f32.mrf.mxu0
      %v615 = vadd.f32 %v505, %v614
      %v616 = vpop.f32.mrf.mxu0
      %v617 = vadd.f32 %v507, %v616
      %618 = vmatmul.bf16.gmra.mxu0 %v543
      %v619 = vpop.f32.mrf.mxu0
      %v620 = vadd.f32 %v510, %v619
      %v621 = vpop.f32.mrf.mxu0
      %v622 = vadd.f32 %v512, %v621
      %623 = vmatmul.bf16.gmra.mxu0 %v545
      %v624 = vpop.f32.mrf.mxu0
      %v625 = vadd.f32 %v515, %v624
      %v626 = vpop.f32.mrf.mxu0
      %v627 = vadd.f32 %v517, %v626
      %628 = vdwg.mxu0
      %v629 = vld [vmem:[%s165] sm:$0xe]
      %v630 = vld [vmem:[%s1 + $0x8] sm:$0xf]
      %v632 = vunpack.c.l.b16 %v629
      %v633 = vpack.c.b16 %v233, %v632
      %vm634 = vcmask 1046528
      %v635 = vrot.slane %v633, 1
      %v636 = vrot.slane %v262, 1
      %v637 = vsel %vm634, %v635, %v636
      %v638 = vrot.slane %v263, 1
      %v639 = vsel %vm634, %v636, %v638
      %v640 = vrot.slane %v264, 1
      %v641 = vsel %vm634, %v638, %v640
      %v642 = vrot.slane %v265, 1
      %v643 = vsel %vm634, %v640, %v642
      %v644 = vrot.slane %v266, 1
      %v645 = vsel %vm634, %v642, %v644
      %v646 = vrot.slane %v267, 1
      %v647 = vsel %vm634, %v644, %v646
      %v648 = vrot.slane %v268, 1
      %v649 = vsel %vm634, %v646, %v648
      %v650 = vrot.slane %v269, 1
      %v651 = vsel %vm634, %v648, %v650
      %v652 = vrot.slane %v270, 1
      %v653 = vsel %vm634, %v650, %v652
      %v654 = vrot.slane %v271, 1
      %v655 = vsel %vm634, %v652, %v654
      %v656 = vrot.slane %v272, 1
      %v657 = vsel %vm634, %v654, %v656
      %v658 = vrot.slane %v273, 1
      %v659 = vsel %vm634, %v656, %v658
      %v660 = vrot.slane %v274, 1
      %v661 = vsel %vm634, %v658, %v660
      %v662 = vrot.slane %v275, 1
      %v663 = vsel %vm634, %v660, %v662
      %v665 = vsel %vm393, %v637, 0
      %v668 = vsel %vm393, %v639, 0
      %v671 = vsel %vm393, %v641, 0
      %v674 = vsel %vm393, %v643, 0
      %v677 = vsel %vm393, %v645, 0
      %v680 = vsel %vm393, %v647, 0
      %v683 = vsel %vm393, %v649, 0
      %v686 = vsel %vm393, %v651, 0
      %v689 = vsel %vm393, %v653, 0
      %v692 = vsel %vm393, %v655, 0
      %v695 = vsel %vm393, %v657, 0
      %v698 = vsel %vm393, %v659, 0
      %v701 = vsel %vm393, %v661, 0
      %v704 = vsel %vm393, %v663, 0
      %v707 = vsel %vm436, %v630, 0
      %709 = vmatpush.bf16.msra.mxu0 0
      %710 = vmatpush.bf16.msra.mxu0 0
      %711 = vmatpush.bf16.msra.mxu0 0
      %712 = vmatpush.bf16.msra.mxu0 0
      %713 = vmatpush.bf16.msra.mxu0 0
      %714 = vmatpush.bf16.msra.mxu0 0
      %715 = vmatpush.bf16.msra.mxu0 0
      %716 = vmatpush.bf16.msra.mxu0 %v707
      %717 = vmatmul.bf16.gmra.mxu0 %v665
      %v718 = vpop.f32.mrf.mxu0
      %v719 = vadd.f32 0.0, %v718
      %v720 = vpop.f32.mrf.mxu0
      %v721 = vadd.f32 0.0, %v720
      %722 = vmatmul.bf16.gmra.mxu0 %v668
      %v723 = vpop.f32.mrf.mxu0
      %v724 = vadd.f32 0.0, %v723
      %v725 = vpop.f32.mrf.mxu0
      %v726 = vadd.f32 0.0, %v725
      %727 = vmatmul.bf16.gmra.mxu0 %v671
      %v728 = vpop.f32.mrf.mxu0
      %v729 = vadd.f32 0.0, %v728
      %v730 = vpop.f32.mrf.mxu0
      %v731 = vadd.f32 0.0, %v730
      %732 = vmatmul.bf16.gmra.mxu0 %v674
      %v733 = vpop.f32.mrf.mxu0
      %v734 = vadd.f32 0.0, %v733
      %v735 = vpop.f32.mrf.mxu0
      %v736 = vadd.f32 0.0, %v735
      %737 = vmatmul.bf16.gmra.mxu0 %v677
      %v738 = vpop.f32.mrf.mxu0
      %v739 = vadd.f32 0.0, %v738
      %v740 = vpop.f32.mrf.mxu0
      %v741 = vadd.f32 0.0, %v740
      %742 = vmatmul.bf16.gmra.mxu0 %v680
      %v743 = vpop.f32.mrf.mxu0
      %v744 = vadd.f32 0.0, %v743
      %v745 = vpop.f32.mrf.mxu0
      %v746 = vadd.f32 0.0, %v745
      %747 = vmatmul.bf16.gmra.mxu0 %v683
      %v748 = vpop.f32.mrf.mxu0
      %v749 = vadd.f32 0.0, %v748
      %v750 = vpop.f32.mrf.mxu0
      %v751 = vadd.f32 0.0, %v750
      %752 = vmatmul.bf16.gmra.mxu0 %v686
      %v753 = vpop.f32.mrf.mxu0
      %v754 = vadd.f32 0.0, %v753
      %v755 = vpop.f32.mrf.mxu0
      %v756 = vadd.f32 0.0, %v755
      %757 = vmatmul.bf16.gmra.mxu0 %v689
      %v758 = vpop.f32.mrf.mxu0
      %v759 = vadd.f32 0.0, %v758
      %v760 = vpop.f32.mrf.mxu0
      %v761 = vadd.f32 0.0, %v760
      %762 = vmatmul.bf16.gmra.mxu0 %v692
      %v763 = vpop.f32.mrf.mxu0
      %v764 = vadd.f32 0.0, %v763
      %v765 = vpop.f32.mrf.mxu0
      %v766 = vadd.f32 0.0, %v765
      %767 = vmatmul.bf16.gmra.mxu0 %v695
      %v768 = vpop.f32.mrf.mxu0
      %v769 = vadd.f32 0.0, %v768
      %v770 = vpop.f32.mrf.mxu0
      %v771 = vadd.f32 0.0, %v770
      %772 = vmatmul.bf16.gmra.mxu0 %v698
      %v773 = vpop.f32.mrf.mxu0
      %v774 = vadd.f32 0.0, %v773
      %v775 = vpop.f32.mrf.mxu0
      %v776 = vadd.f32 0.0, %v775
      %777 = vmatmul.bf16.gmra.mxu0 %v701
      %v778 = vpop.f32.mrf.mxu0
      %v779 = vadd.f32 0.0, %v778
      %v780 = vpop.f32.mrf.mxu0
      %v781 = vadd.f32 0.0, %v780
      %782 = vmatmul.bf16.gmra.mxu0 %v704
      %v783 = vpop.f32.mrf.mxu0
      %v784 = vadd.f32 0.0, %v783
      %v785 = vpop.f32.mrf.mxu0
      %v786 = vadd.f32 0.0, %v785
      %787 = vdwg.mxu0
      %v788 = vadd.f32 %v560, %v719
      %v789 = vadd.f32 %v562, %v721
      %v790 = vadd.f32 %v565, %v724
      %v791 = vadd.f32 %v567, %v726
      %v792 = vadd.f32 %v570, %v729
      %v793 = vadd.f32 %v572, %v731
      %v794 = vadd.f32 %v575, %v734
      %v795 = vadd.f32 %v577, %v736
      %v796 = vadd.f32 %v580, %v739
      %v797 = vadd.f32 %v582, %v741
      %v798 = vadd.f32 %v585, %v744
      %v799 = vadd.f32 %v587, %v746
      %v800 = vadd.f32 %v590, %v749
      %v801 = vadd.f32 %v592, %v751
      %v802 = vadd.f32 %v595, %v754
      %v803 = vadd.f32 %v597, %v756
      %v804 = vadd.f32 %v600, %v759
      %v805 = vadd.f32 %v602, %v761
      %v806 = vadd.f32 %v605, %v764
      %v807 = vadd.f32 %v607, %v766
      %v808 = vadd.f32 %v610, %v769
      %v809 = vadd.f32 %v612, %v771
      %v810 = vadd.f32 %v615, %v774
      %v811 = vadd.f32 %v617, %v776
      %v812 = vadd.f32 %v620, %v779
      %v813 = vadd.f32 %v622, %v781
      %v814 = vadd.f32 %v625, %v784
      %v815 = vadd.f32 %v627, %v786
      %v816 = vld [vmem:[%s165 + $0x4] sm:$0x8]
      %v817 = vld [vmem:[%s165 + $0x8] sm:$0xf]
      %v818 = vld [vmem:[%s165 + $0xc] sm:$0xf]
      %v819 = vld [vmem:[%s165 + $0x10] sm:$0xf]
      %v820 = vld [vmem:[%s165 + $0x14] sm:$0xf]
      %v821 = vld [vmem:[%s165 + $0x18] sm:$0xf]
      %v822 = vld [vmem:[%s165 + $0x1c] sm:$0xf]
      %v823 = vld [vmem:[%s165 + $0x20] sm:$0xf]
      %v824 = vld [vmem:[%s165 + $0x24] sm:$0xf]
      %v825 = vld [vmem:[%s165 + $0x28] sm:$0xf]
      %v826 = vld [vmem:[%s165 + $0x2c] sm:$0xf]
      %v827 = vld [vmem:[%s165 + $0x30] sm:$0xf]
      %v828 = vld [vmem:[%s165 + $0x34] sm:$0xf]
      %v829 = vld [vmem:[%s165 + $0x38] sm:$0xf]
      %v830 = vld [vmem:[%s165 + $0x3c] sm:$0xf]
      %v831 = vld [vmem:[%s165 + $0x40] sm:$0xf]
      %v832 = vld [vmem:[%s165 + $0x44] sm:$0xf]
      %v833 = vld [vmem:[%s165 + $0x48] sm:$0xf]
      %v834 = vld [vmem:[%s165 + $0x4c] sm:$0xf]
      %v835 = vld [vmem:[%s165 + $0x50] sm:$0xf]
      %v836 = vld [vmem:[%s165 + $0x54] sm:$0xf]
      %v837 = vld [vmem:[%s165 + $0x58] sm:$0xf]
      %v838 = vld [vmem:[%s165 + $0x5c] sm:$0xf]
      %v839 = vld [vmem:[%s165 + $0x60] sm:$0xf]
      %v840 = vld [vmem:[%s165 + $0x64] sm:$0xf]
      %v841 = vld [vmem:[%s165 + $0x68] sm:$0xf]
      %v842 = vld [vmem:[%s165 + $0x6c] sm:$0xf]
      %v843 = vld [vmem:[%s165 + $0x70] sm:$0xf]
      %v844 = vld [vmem:[%s165 + $0x74] sm:$0x7]
      %v845 = vld [vmem:[%s1 + $0xc] sm:$0xf]
      %v875 = vunpack.c.l.b16 %v816
      %v876 = vunpack.c.l.b16 %v817
      %v877 = vunpack.c.l.b16 %v818
      %v878 = vunpack.c.l.b16 %v819
      %v879 = vunpack.c.l.b16 %v820
      %v880 = vunpack.c.l.b16 %v821
      %v881 = vunpack.c.l.b16 %v822
      %v882 = vunpack.c.l.b16 %v823
      %v883 = vunpack.c.l.b16 %v824
      %v884 = vunpack.c.l.b16 %v825
      %v885 = vunpack.c.l.b16 %v826
      %v886 = vunpack.c.l.b16 %v827
      %v887 = vunpack.c.l.b16 %v828
      %v888 = vunpack.c.l.b16 %v829
      %v889 = vunpack.c.l.b16 %v830
      %v890 = vunpack.c.l.b16 %v831
      %v891 = vunpack.c.l.b16 %v832
      %v892 = vunpack.c.l.b16 %v833
      %v893 = vunpack.c.l.b16 %v834
      %v894 = vunpack.c.l.b16 %v835
      %v895 = vunpack.c.l.b16 %v836
      %v896 = vunpack.c.l.b16 %v837
      %v897 = vunpack.c.l.b16 %v838
      %v898 = vunpack.c.l.b16 %v839
      %v899 = vunpack.c.l.b16 %v840
      %v900 = vunpack.c.l.b16 %v841
      %v901 = vunpack.c.l.b16 %v842
      %v902 = vunpack.c.l.b16 %v843
      %v903 = vunpack.c.l.b16 %v844
      %v904 = vpack.c.b16 %v876, %v875
      %v905 = vpack.c.b16 %v878, %v877
      %v906 = vpack.c.b16 %v880, %v879
      %v907 = vpack.c.b16 %v882, %v881
      %v908 = vpack.c.b16 %v884, %v883
      %v909 = vpack.c.b16 %v886, %v885
      %v910 = vpack.c.b16 %v888, %v887
      %v911 = vpack.c.b16 %v890, %v889
      %v912 = vpack.c.b16 %v892, %v891
      %v913 = vpack.c.b16 %v894, %v893
      %v914 = vpack.c.b16 %v896, %v895
      %v915 = vpack.c.b16 %v898, %v897
      %v916 = vpack.c.b16 %v900, %v899
      %v917 = vpack.c.b16 %v902, %v901
      %v918 = vpack.c.b16 %v903, %v903
      %vm919 = vcmask 1044480
      %v920 = vrot.slane %v904, 3
      %v921 = vrot.slane %v905, 3
      %v922 = vsel %vm919, %v920, %v921
      %v923 = vrot.slane %v906, 3
      %v924 = vsel %vm919, %v921, %v923
      %v925 = vrot.slane %v907, 3
      %v926 = vsel %vm919, %v923, %v925
      %v927 = vrot.slane %v908, 3
      %v928 = vsel %vm919, %v925, %v927
      %v929 = vrot.slane %v909, 3
      %v930 = vsel %vm919, %v927, %v929
      %v931 = vrot.slane %v910, 3
      %v932 = vsel %vm919, %v929, %v931
      %v933 = vrot.slane %v911, 3
      %v934 = vsel %vm919, %v931, %v933
      %v935 = vrot.slane %v912, 3
      %v936 = vsel %vm919, %v933, %v935
      %v937 = vrot.slane %v913, 3
      %v938 = vsel %vm919, %v935, %v937
      %v939 = vrot.slane %v914, 3
      %v940 = vsel %vm919, %v937, %v939
      %v941 = vrot.slane %v915, 3
      %v942 = vsel %vm919, %v939, %v941
      %v943 = vrot.slane %v916, 3
      %v944 = vsel %vm919, %v941, %v943
      %v945 = vrot.slane %v917, 3
      %v946 = vsel %vm919, %v943, %v945
      %v947 = vrot.slane %v918, 3
      %v948 = vsel %vm919, %v945, %v947
      %v950 = vsel %vm393, %v922, 0
      %v953 = vsel %vm393, %v924, 0
      %v956 = vsel %vm393, %v926, 0
      %v959 = vsel %vm393, %v928, 0
      %v962 = vsel %vm393, %v930, 0
      %v965 = vsel %vm393, %v932, 0
      %v968 = vsel %vm393, %v934, 0
      %v971 = vsel %vm393, %v936, 0
      %v974 = vsel %vm393, %v938, 0
      %v977 = vsel %vm393, %v940, 0
      %v980 = vsel %vm393, %v942, 0
      %v983 = vsel %vm393, %v944, 0
      %v986 = vsel %vm393, %v946, 0
      %v989 = vsel %vm393, %v948, 0
      %v992 = vsel %vm436, %v845, 0
      %994 = vmatpush.bf16.msra.mxu0 0
      %995 = vmatpush.bf16.msra.mxu0 0
      %996 = vmatpush.bf16.msra.mxu0 0
      %997 = vmatpush.bf16.msra.mxu0 0
      %998 = vmatpush.bf16.msra.mxu0 0
      %999 = vmatpush.bf16.msra.mxu0 0
      %1000 = vmatpush.bf16.msra.mxu0 0
      %1001 = vmatpush.bf16.msra.mxu0 %v992
      %1002 = vmatmul.bf16.gmra.mxu0 %v950
      %v1003 = vpop.f32.mrf.mxu0
      %v1004 = vadd.f32 0.0, %v1003
      %v1005 = vpop.f32.mrf.mxu0
      %v1006 = vadd.f32 0.0, %v1005
      %1007 = vmatmul.bf16.gmra.mxu0 %v953
      %v1008 = vpop.f32.mrf.mxu0
      %v1009 = vadd.f32 0.0, %v1008
      %v1010 = vpop.f32.mrf.mxu0
      %v1011 = vadd.f32 0.0, %v1010
      %1012 = vmatmul.bf16.gmra.mxu0 %v956
      %v1013 = vpop.f32.mrf.mxu0
      %v1014 = vadd.f32 0.0, %v1013
      %v1015 = vpop.f32.mrf.mxu0
      %v1016 = vadd.f32 0.0, %v1015
      %1017 = vmatmul.bf16.gmra.mxu0 %v959
      %v1018 = vpop.f32.mrf.mxu0
      %v1019 = vadd.f32 0.0, %v1018
      %v1020 = vpop.f32.mrf.mxu0
      %v1021 = vadd.f32 0.0, %v1020
      %1022 = vmatmul.bf16.gmra.mxu0 %v962
      %v1023 = vpop.f32.mrf.mxu0
      %v1024 = vadd.f32 0.0, %v1023
      %v1025 = vpop.f32.mrf.mxu0
      %v1026 = vadd.f32 0.0, %v1025
      %1027 = vmatmul.bf16.gmra.mxu0 %v965
      %v1028 = vpop.f32.mrf.mxu0
      %v1029 = vadd.f32 0.0, %v1028
      %v1030 = vpop.f32.mrf.mxu0
      %v1031 = vadd.f32 0.0, %v1030
      %1032 = vmatmul.bf16.gmra.mxu0 %v968
      %v1033 = vpop.f32.mrf.mxu0
      %v1034 = vadd.f32 0.0, %v1033
      %v1035 = vpop.f32.mrf.mxu0
      %v1036 = vadd.f32 0.0, %v1035
      %1037 = vmatmul.bf16.gmra.mxu0 %v971
      %v1038 = vpop.f32.mrf.mxu0
      %v1039 = vadd.f32 0.0, %v1038
      %v1040 = vpop.f32.mrf.mxu0
      %v1041 = vadd.f32 0.0, %v1040
      %1042 = vmatmul.bf16.gmra.mxu0 %v974
      %v1043 = vpop.f32.mrf.mxu0
      %v1044 = vadd.f32 0.0, %v1043
      %v1045 = vpop.f32.mrf.mxu0
      %v1046 = vadd.f32 0.0, %v1045
      %1047 = vmatmul.bf16.gmra.mxu0 %v977
      %v1048 = vpop.f32.mrf.mxu0
      %v1049 = vadd.f32 0.0, %v1048
      %v1050 = vpop.f32.mrf.mxu0
      %v1051 = vadd.f32 0.0, %v1050
      %1052 = vmatmul.bf16.gmra.mxu0 %v980
      %v1053 = vpop.f32.mrf.mxu0
      %v1054 = vadd.f32 0.0, %v1053
      %v1055 = vpop.f32.mrf.mxu0
      %v1056 = vadd.f32 0.0, %v1055
      %1057 = vmatmul.bf16.gmra.mxu0 %v983
      %v1058 = vpop.f32.mrf.mxu0
      %v1059 = vadd.f32 0.0, %v1058
      %v1060 = vpop.f32.mrf.mxu0
      %v1061 = vadd.f32 0.0, %v1060
      %1062 = vmatmul.bf16.gmra.mxu0 %v986
      %v1063 = vpop.f32.mrf.mxu0
      %v1064 = vadd.f32 0.0, %v1063
      %v1065 = vpop.f32.mrf.mxu0
      %v1066 = vadd.f32 0.0, %v1065
      %1067 = vmatmul.bf16.gmra.mxu0 %v989
      %v1068 = vpop.f32.mrf.mxu0
      %v1069 = vadd.f32 0.0, %v1068
      %v1070 = vpop.f32.mrf.mxu0
      %v1071 = vadd.f32 0.0, %v1070
      %1072 = vdwg.mxu0
      %v1073 = vadd.f32 %v788, %v1004
      %v1074 = vadd.f32 %v789, %v1006
      %v1075 = vadd.f32 %v790, %v1009
      %v1076 = vadd.f32 %v791, %v1011
      %v1077 = vadd.f32 %v792, %v1014
      %v1078 = vadd.f32 %v793, %v1016
      %v1079 = vadd.f32 %v794, %v1019
      %v1080 = vadd.f32 %v795, %v1021
      %v1081 = vadd.f32 %v796, %v1024
      %v1082 = vadd.f32 %v797, %v1026
      %v1083 = vadd.f32 %v798, %v1029
      %v1084 = vadd.f32 %v799, %v1031
      %v1085 = vadd.f32 %v800, %v1034
      %v1086 = vadd.f32 %v801, %v1036
      %v1087 = vadd.f32 %v802, %v1039
      %v1088 = vadd.f32 %v803, %v1041
      %v1089 = vadd.f32 %v804, %v1044
      %v1090 = vadd.f32 %v805, %v1046
      %v1091 = vadd.f32 %v806, %v1049
      %v1092 = vadd.f32 %v807, %v1051
      %v1093 = vadd.f32 %v808, %v1054
      %v1094 = vadd.f32 %v809, %v1056
      %v1095 = vadd.f32 %v810, %v1059
      %v1096 = vadd.f32 %v811, %v1061
      %v1097 = vadd.f32 %v812, %v1064
      %v1098 = vadd.f32 %v813, %v1066
      %v1099 = vadd.f32 %v814, %v1069
      %v1100 = vadd.f32 %v815, %v1071
      %v1101 = vld [vmem:[%s165 + $0x74] sm:$0xf]
      %v1102 = vld [vmem:[%s1 + $0x10] sm:$0xf]
      %v1104 = vunpack.c.l.b16 %v1101
      %v1105 = vpack.c.b16 %v1104, %v1104
      %vm1106 = vsmask.f32 4352
      %v1108 = vshrl.u32 %v904, 16
      %v1110 = vrot.slane %v1108, 3
      %v1111 = vshll.u32 %v904, 16
      %v1113 = vrot.slane %v1111, 4
      %v1114 = vor.u32 %v1110, %v1113
      %v1116 = vshrl.u32 %v905, 16
      %v1118 = vrot.slane %v1116, 3
      %v1119 = vshll.u32 %v905, 16
      %v1121 = vrot.slane %v1119, 4
      %v1122 = vor.u32 %v1118, %v1121
      %v1123 = vsel %vm1106, %v1114, %v1122
      %v1125 = vshrl.u32 %v906, 16
      %v1127 = vrot.slane %v1125, 3
      %v1128 = vshll.u32 %v906, 16
      %v1130 = vrot.slane %v1128, 4
      %v1131 = vor.u32 %v1127, %v1130
      %v1132 = vsel %vm1106, %v1122, %v1131
      %v1134 = vshrl.u32 %v907, 16
      %v1136 = vrot.slane %v1134, 3
      %v1137 = vshll.u32 %v907, 16
      %v1139 = vrot.slane %v1137, 4
      %v1140 = vor.u32 %v1136, %v1139
      %v1141 = vsel %vm1106, %v1131, %v1140
      %v1143 = vshrl.u32 %v908, 16
      %v1145 = vrot.slane %v1143, 3
      %v1146 = vshll.u32 %v908, 16
      %v1148 = vrot.slane %v1146, 4
      %v1149 = vor.u32 %v1145, %v1148
      %v1150 = vsel %vm1106, %v1140, %v1149
      %v1152 = vshrl.u32 %v909, 16
      %v1154 = vrot.slane %v1152, 3
      %v1155 = vshll.u32 %v909, 16
      %v1157 = vrot.slane %v1155, 4
      %v1158 = vor.u32 %v1154, %v1157
      %v1159 = vsel %vm1106, %v1149, %v1158
      %v1161 = vshrl.u32 %v910, 16
      %v1163 = vrot.slane %v1161, 3
      %v1164 = vshll.u32 %v910, 16
      %v1166 = vrot.slane %v1164, 4
      %v1167 = vor.u32 %v1163, %v1166
      %v1168 = vsel %vm1106, %v1158, %v1167
      %v1170 = vshrl.u32 %v911, 16
      %v1172 = vrot.slane %v1170, 3
      %v1173 = vshll.u32 %v911, 16
      %v1175 = vrot.slane %v1173, 4
      %v1176 = vor.u32 %v1172, %v1175
      %v1177 = vsel %vm1106, %v1167, %v1176
      %v1179 = vshrl.u32 %v912, 16
      %v1181 = vrot.slane %v1179, 3
      %v1182 = vshll.u32 %v912, 16
      %v1184 = vrot.slane %v1182, 4
      %v1185 = vor.u32 %v1181, %v1184
      %v1186 = vsel %vm1106, %v1176, %v1185
      %v1188 = vshrl.u32 %v913, 16
      %v1190 = vrot.slane %v1188, 3
      %v1191 = vshll.u32 %v913, 16
      %v1193 = vrot.slane %v1191, 4
      %v1194 = vor.u32 %v1190, %v1193
      %v1195 = vsel %vm1106, %v1185, %v1194
      %v1197 = vshrl.u32 %v914, 16
      %v1199 = vrot.slane %v1197, 3
      %v1200 = vshll.u32 %v914, 16
      %v1202 = vrot.slane %v1200, 4
      %v1203 = vor.u32 %v1199, %v1202
      %v1204 = vsel %vm1106, %v1194, %v1203
      %v1206 = vshrl.u32 %v915, 16
      %v1208 = vrot.slane %v1206, 3
      %v1209 = vshll.u32 %v915, 16
      %v1211 = vrot.slane %v1209, 4
      %v1212 = vor.u32 %v1208, %v1211
      %v1213 = vsel %vm1106, %v1203, %v1212
      %v1215 = vshrl.u32 %v916, 16
      %v1217 = vrot.slane %v1215, 3
      %v1218 = vshll.u32 %v916, 16
      %v1220 = vrot.slane %v1218, 4
      %v1221 = vor.u32 %v1217, %v1220
      %v1222 = vsel %vm1106, %v1212, %v1221
      %v1224 = vshrl.u32 %v917, 16
      %v1226 = vrot.slane %v1224, 3
      %v1227 = vshll.u32 %v917, 16
      %v1229 = vrot.slane %v1227, 4
      %v1230 = vor.u32 %v1226, %v1229
      %v1231 = vsel %vm1106, %v1221, %v1230
      %v1233 = vshrl.u32 %v1105, 16
      %v1235 = vrot.slane %v1233, 3
      %v1236 = vshll.u32 %v1105, 16
      %v1238 = vrot.slane %v1236, 4
      %v1239 = vor.u32 %v1235, %v1238
      %v1240 = vsel %vm1106, %v1230, %v1239
      %v1242 = vsel %vm393, %v1123, 0
      %v1245 = vsel %vm393, %v1132, 0
      %v1248 = vsel %vm393, %v1141, 0
      %v1251 = vsel %vm393, %v1150, 0
      %v1254 = vsel %vm393, %v1159, 0
      %v1257 = vsel %vm393, %v1168, 0
      %v1260 = vsel %vm393, %v1177, 0
      %v1263 = vsel %vm393, %v1186, 0
      %v1266 = vsel %vm393, %v1195, 0
      %v1269 = vsel %vm393, %v1204, 0
      %v1272 = vsel %vm393, %v1213, 0
      %v1275 = vsel %vm393, %v1222, 0
      %v1278 = vsel %vm393, %v1231, 0
      %v1281 = vsel %vm393, %v1240, 0
      %v1284 = vsel %vm436, %v1102, 0
      %1286 = vmatpush.bf16.msra.mxu0 0
      %1287 = vmatpush.bf16.msra.mxu0 0
      %1288 = vmatpush.bf16.msra.mxu0 0
      %1289 = vmatpush.bf16.msra.mxu0 0
      %1290 = vmatpush.bf16.msra.mxu0 0
      %1291 = vmatpush.bf16.msra.mxu0 0
      %1292 = vmatpush.bf16.msra.mxu0 0
      %1293 = vmatpush.bf16.msra.mxu0 %v1284
      %1294 = vmatmul.bf16.gmra.mxu0 %v1242
      %v1295 = vpop.f32.mrf.mxu0
      %v1296 = vadd.f32 0.0, %v1295
      %v1297 = vpop.f32.mrf.mxu0
      %v1298 = vadd.f32 0.0, %v1297
      %1299 = vmatmul.bf16.gmra.mxu0 %v1245
      %v1300 = vpop.f32.mrf.mxu0
      %v1301 = vadd.f32 0.0, %v1300
      %v1302 = vpop.f32.mrf.mxu0
      %v1303 = vadd.f32 0.0, %v1302
      %1304 = vmatmul.bf16.gmra.mxu0 %v1248
      %v1305 = vpop.f32.mrf.mxu0
      %v1306 = vadd.f32 0.0, %v1305
      %v1307 = vpop.f32.mrf.mxu0
      %v1308 = vadd.f32 0.0, %v1307
      %1309 = vmatmul.bf16.gmra.mxu0 %v1251
      %v1310 = vpop.f32.mrf.mxu0
      %v1311 = vadd.f32 0.0, %v1310
      %v1312 = vpop.f32.mrf.mxu0
      %v1313 = vadd.f32 0.0, %v1312
      %1314 = vmatmul.bf16.gmra.mxu0 %v1254
      %v1315 = vpop.f32.mrf.mxu0
      %v1316 = vadd.f32 0.0, %v1315
      %v1317 = vpop.f32.mrf.mxu0
      %v1318 = vadd.f32 0.0, %v1317
      %1319 = vmatmul.bf16.gmra.mxu0 %v1257
      %v1320 = vpop.f32.mrf.mxu0
      %v1321 = vadd.f32 0.0, %v1320
      %v1322 = vpop.f32.mrf.mxu0
      %v1323 = vadd.f32 0.0, %v1322
      %1324 = vmatmul.bf16.gmra.mxu0 %v1260
      %v1325 = vpop.f32.mrf.mxu0
      %v1326 = vadd.f32 0.0, %v1325
      %v1327 = vpop.f32.mrf.mxu0
      %v1328 = vadd.f32 0.0, %v1327
      %1329 = vmatmul.bf16.gmra.mxu0 %v1263
      %v1330 = vpop.f32.mrf.mxu0
      %v1331 = vadd.f32 0.0, %v1330
      %v1332 = vpop.f32.mrf.mxu0
      %v1333 = vadd.f32 0.0, %v1332
      %1334 = vmatmul.bf16.gmra.mxu0 %v1266
      %v1335 = vpop.f32.mrf.mxu0
      %v1336 = vadd.f32 0.0, %v1335
      %v1337 = vpop.f32.mrf.mxu0
      %v1338 = vadd.f32 0.0, %v1337
      %1339 = vmatmul.bf16.gmra.mxu0 %v1269
      %v1340 = vpop.f32.mrf.mxu0
      %v1341 = vadd.f32 0.0, %v1340
      %v1342 = vpop.f32.mrf.mxu0
      %v1343 = vadd.f32 0.0, %v1342
      %1344 = vmatmul.bf16.gmra.mxu0 %v1272
      %v1345 = vpop.f32.mrf.mxu0
      %v1346 = vadd.f32 0.0, %v1345
      %v1347 = vpop.f32.mrf.mxu0
      %v1348 = vadd.f32 0.0, %v1347
      %1349 = vmatmul.bf16.gmra.mxu0 %v1275
      %v1350 = vpop.f32.mrf.mxu0
      %v1351 = vadd.f32 0.0, %v1350
      %v1352 = vpop.f32.mrf.mxu0
      %v1353 = vadd.f32 0.0, %v1352
      %1354 = vmatmul.bf16.gmra.mxu0 %v1278
      %v1355 = vpop.f32.mrf.mxu0
      %v1356 = vadd.f32 0.0, %v1355
      %v1357 = vpop.f32.mrf.mxu0
      %v1358 = vadd.f32 0.0, %v1357
      %1359 = vmatmul.bf16.gmra.mxu0 %v1281
      %v1360 = vpop.f32.mrf.mxu0
      %v1361 = vadd.f32 0.0, %v1360
      %v1362 = vpop.f32.mrf.mxu0
      %v1363 = vadd.f32 0.0, %v1362
      %1364 = vdwg.mxu0
      %v1365 = vadd.f32 %v1073, %v1296
      %v1366 = vadd.f32 %v1074, %v1298
      %v1367 = vadd.f32 %v1075, %v1301
      %v1368 = vadd.f32 %v1076, %v1303
      %v1369 = vadd.f32 %v1077, %v1306
      %v1370 = vadd.f32 %v1078, %v1308
      %v1371 = vadd.f32 %v1079, %v1311
      %v1372 = vadd.f32 %v1080, %v1313
      %v1373 = vadd.f32 %v1081, %v1316
      %v1374 = vadd.f32 %v1082, %v1318
      %v1375 = vadd.f32 %v1083, %v1321
      %v1376 = vadd.f32 %v1084, %v1323
      %v1377 = vadd.f32 %v1085, %v1326
      %v1378 = vadd.f32 %v1086, %v1328
      %v1379 = vadd.f32 %v1087, %v1331
      %v1380 = vadd.f32 %v1088, %v1333
      %v1381 = vadd.f32 %v1089, %v1336
      %v1382 = vadd.f32 %v1090, %v1338
      %v1383 = vadd.f32 %v1091, %v1341
      %v1384 = vadd.f32 %v1092, %v1343
      %v1385 = vadd.f32 %v1093, %v1346
      %v1386 = vadd.f32 %v1094, %v1348
      %v1387 = vadd.f32 %v1095, %v1351
      %v1388 = vadd.f32 %v1096, %v1353
      %v1389 = vadd.f32 %v1097, %v1356
      %v1390 = vadd.f32 %v1098, %v1358
      %v1391 = vadd.f32 %v1099, %v1361
      %v1392 = vadd.f32 %v1100, %v1363
      %v1393 = vld [vmem:[%s1 + $0x14] sm:$0xf]
      %v1394 = vpack.c.b16 %v877, %v876
      %v1395 = vpack.c.b16 %v879, %v878
      %v1396 = vpack.c.b16 %v881, %v880
      %v1397 = vpack.c.b16 %v883, %v882
      %v1398 = vpack.c.b16 %v885, %v884
      %v1399 = vpack.c.b16 %v887, %v886
      %v1400 = vpack.c.b16 %v889, %v888
      %v1401 = vpack.c.b16 %v891, %v890
      %v1402 = vpack.c.b16 %v893, %v892
      %v1403 = vpack.c.b16 %v895, %v894
      %v1404 = vpack.c.b16 %v897, %v896
      %v1405 = vpack.c.b16 %v899, %v898
      %v1406 = vpack.c.b16 %v901, %v900
      %v1407 = vpack.c.b16 %v1104, %v902
      %v1409 = vsel %vm393, %v1394, 0
      %v1412 = vsel %vm393, %v1395, 0
      %v1415 = vsel %vm393, %v1396, 0
      %v1418 = vsel %vm393, %v1397, 0
      %v1421 = vsel %vm393, %v1398, 0
      %v1424 = vsel %vm393, %v1399, 0
      %v1427 = vsel %vm393, %v1400, 0
      %v1430 = vsel %vm393, %v1401, 0
      %v1433 = vsel %vm393, %v1402, 0
      %v1436 = vsel %vm393, %v1403, 0
      %v1439 = vsel %vm393, %v1404, 0
      %v1442 = vsel %vm393, %v1405, 0
      %v1445 = vsel %vm393, %v1406, 0
      %v1448 = vsel %vm393, %v1407, 0
      %v1451 = vsel %vm436, %v1393, 0
      %1453 = vmatpush.bf16.msra.mxu0 0
      %1454 = vmatpush.bf16.msra.mxu0 0
      %1455 = vmatpush.bf16.msra.mxu0 0
      %1456 = vmatpush.bf16.msra.mxu0 0
      %1457 = vmatpush.bf16.msra.mxu0 0
      %1458 = vmatpush.bf16.msra.mxu0 0
      %1459 = vmatpush.bf16.msra.mxu0 0
      %1460 = vmatpush.bf16.msra.mxu0 %v1451
      %1461 = vmatmul.bf16.gmra.mxu0 %v1409
      %v1462 = vpop.f32.mrf.mxu0
      %v1463 = vadd.f32 0.0, %v1462
      %v1464 = vpop.f32.mrf.mxu0
      %v1465 = vadd.f32 0.0, %v1464
      %1466 = vmatmul.bf16.gmra.mxu0 %v1412
      %v1467 = vpop.f32.mrf.mxu0
      %v1468 = vadd.f32 0.0, %v1467
      %v1469 = vpop.f32.mrf.mxu0
      %v1470 = vadd.f32 0.0, %v1469
      %1471 = vmatmul.bf16.gmra.mxu0 %v1415
      %v1472 = vpop.f32.mrf.mxu0
      %v1473 = vadd.f32 0.0, %v1472
      %v1474 = vpop.f32.mrf.mxu0
      %v1475 = vadd.f32 0.0, %v1474
      %1476 = vmatmul.bf16.gmra.mxu0 %v1418
      %v1477 = vpop.f32.mrf.mxu0
      %v1478 = vadd.f32 0.0, %v1477
      %v1479 = vpop.f32.mrf.mxu0
      %v1480 = vadd.f32 0.0, %v1479
      %1481 = vmatmul.bf16.gmra.mxu0 %v1421
      %v1482 = vpop.f32.mrf.mxu0
      %v1483 = vadd.f32 0.0, %v1482
      %v1484 = vpop.f32.mrf.mxu0
      %v1485 = vadd.f32 0.0, %v1484
      %1486 = vmatmul.bf16.gmra.mxu0 %v1424
      %v1487 = vpop.f32.mrf.mxu0
      %v1488 = vadd.f32 0.0, %v1487
      %v1489 = vpop.f32.mrf.mxu0
      %v1490 = vadd.f32 0.0, %v1489
      %1491 = vmatmul.bf16.gmra.mxu0 %v1427
      %v1492 = vpop.f32.mrf.mxu0
      %v1493 = vadd.f32 0.0, %v1492
      %v1494 = vpop.f32.mrf.mxu0
      %v1495 = vadd.f32 0.0, %v1494
      %1496 = vmatmul.bf16.gmra.mxu0 %v1430
      %v1497 = vpop.f32.mrf.mxu0
      %v1498 = vadd.f32 0.0, %v1497
      %v1499 = vpop.f32.mrf.mxu0
      %v1500 = vadd.f32 0.0, %v1499
      %1501 = vmatmul.bf16.gmra.mxu0 %v1433
      %v1502 = vpop.f32.mrf.mxu0
      %v1503 = vadd.f32 0.0, %v1502
      %v1504 = vpop.f32.mrf.mxu0
      %v1505 = vadd.f32 0.0, %v1504
      %1506 = vmatmul.bf16.gmra.mxu0 %v1436
      %v1507 = vpop.f32.mrf.mxu0
      %v1508 = vadd.f32 0.0, %v1507
      %v1509 = vpop.f32.mrf.mxu0
      %v1510 = vadd.f32 0.0, %v1509
      %1511 = vmatmul.bf16.gmra.mxu0 %v1439
      %v1512 = vpop.f32.mrf.mxu0
      %v1513 = vadd.f32 0.0, %v1512
      %v1514 = vpop.f32.mrf.mxu0
      %v1515 = vadd.f32 0.0, %v1514
      %1516 = vmatmul.bf16.gmra.mxu0 %v1442
      %v1517 = vpop.f32.mrf.mxu0
      %v1518 = vadd.f32 0.0, %v1517
      %v1519 = vpop.f32.mrf.mxu0
      %v1520 = vadd.f32 0.0, %v1519
      %1521 = vmatmul.bf16.gmra.mxu0 %v1445
      %v1522 = vpop.f32.mrf.mxu0
      %v1523 = vadd.f32 0.0, %v1522
      %v1524 = vpop.f32.mrf.mxu0
      %v1525 = vadd.f32 0.0, %v1524
      %1526 = vmatmul.bf16.gmra.mxu0 %v1448
      %v1527 = vpop.f32.mrf.mxu0
      %v1528 = vadd.f32 0.0, %v1527
      %v1529 = vpop.f32.mrf.mxu0
      %v1530 = vadd.f32 0.0, %v1529
      %1531 = vdwg.mxu0
      %v1532 = vadd.f32 %v1365, %v1463
      %v1533 = vadd.f32 %v1366, %v1465
      %v1534 = vadd.f32 %v1367, %v1468
      %v1535 = vadd.f32 %v1368, %v1470
      %v1536 = vadd.f32 %v1369, %v1473
      %v1537 = vadd.f32 %v1370, %v1475
      %v1538 = vadd.f32 %v1371, %v1478
      %v1539 = vadd.f32 %v1372, %v1480
      %v1540 = vadd.f32 %v1373, %v1483
      %v1541 = vadd.f32 %v1374, %v1485
      %v1542 = vadd.f32 %v1375, %v1488
      %v1543 = vadd.f32 %v1376, %v1490
      %v1544 = vadd.f32 %v1377, %v1493
      %v1545 = vadd.f32 %v1378, %v1495
      %v1546 = vadd.f32 %v1379, %v1498
      %v1547 = vadd.f32 %v1380, %v1500
      %v1548 = vadd.f32 %v1381, %v1503
      %v1549 = vadd.f32 %v1382, %v1505
      %v1550 = vadd.f32 %v1383, %v1508
      %v1551 = vadd.f32 %v1384, %v1510
      %v1552 = vadd.f32 %v1385, %v1513
      %v1553 = vadd.f32 %v1386, %v1515
      %v1554 = vadd.f32 %v1387, %v1518
      %v1555 = vadd.f32 %v1388, %v1520
      %v1556 = vadd.f32 %v1389, %v1523
      %v1557 = vadd.f32 %v1390, %v1525
      %v1558 = vadd.f32 %v1391, %v1528
      %v1559 = vadd.f32 %v1392, %v1530
      %v1560 = vld [vmem:[%s165 + $0xc] sm:$0xc]
      %v1561 = vld [vmem:[%s165 + $0x10] sm:$0xf]
      %v1562 = vld [vmem:[%s165 + $0x14] sm:$0xf]
      %v1563 = vld [vmem:[%s165 + $0x18] sm:$0xf]
      %v1564 = vld [vmem:[%s165 + $0x1c] sm:$0xf]
      %v1565 = vld [vmem:[%s165 + $0x20] sm:$0xf]
      %v1566 = vld [vmem:[%s165 + $0x24] sm:$0xf]
      %v1567 = vld [vmem:[%s165 + $0x28] sm:$0xf]
      %v1568 = vld [vmem:[%s165 + $0x2c] sm:$0xf]
      %v1569 = vld [vmem:[%s165 + $0x30] sm:$0xf]
      %v1570 = vld [vmem:[%s165 + $0x34] sm:$0xf]
      %v1571 = vld [vmem:[%s165 + $0x38] sm:$0xf]
      %v1572 = vld [vmem:[%s165 + $0x3c] sm:$0xf]
      %v1573 = vld [vmem:[%s165 + $0x40] sm:$0xf]
      %v1574 = vld [vmem:[%s165 + $0x44] sm:$0xf]
      %v1575 = vld [vmem:[%s165 + $0x48] sm:$0xf]
      %v1576 = vld [vmem:[%s165 + $0x4c] sm:$0xf]
      %v1577 = vld [vmem:[%s165 + $0x50] sm:$0xf]
      %v1578 = vld [vmem:[%s165 + $0x54] sm:$0xf]
      %v1579 = vld [vmem:[%s165 + $0x58] sm:$0xf]
      %v1580 = vld [vmem:[%s165 + $0x5c] sm:$0xf]
      %v1581 = vld [vmem:[%s165 + $0x60] sm:$0xf]
      %v1582 = vld [vmem:[%s165 + $0x64] sm:$0xf]
      %v1583 = vld [vmem:[%s165 + $0x68] sm:$0xf]
      %v1584 = vld [vmem:[%s165 + $0x6c] sm:$0xf]
      %v1585 = vld [vmem:[%s165 + $0x70] sm:$0xf]
      %v1586 = vld [vmem:[%s165 + $0x74] sm:$0xf]
      %v1587 = vld [vmem:[%s165 + $0x78] sm:$0xf]
      %v1588 = vld [vmem:[%s165 + $0x7c] sm:$0x3]
      %v1589 = vld [vmem:[%s1 + $0x18] sm:$0xf]
      %v1619 = vunpack.c.l.b16 %v1560
      %v1620 = vunpack.c.l.b16 %v1561
      %v1621 = vunpack.c.l.b16 %v1562
      %v1622 = vunpack.c.l.b16 %v1563
      %v1623 = vunpack.c.l.b16 %v1564
      %v1624 = vunpack.c.l.b16 %v1565
      %v1625 = vunpack.c.l.b16 %v1566
      %v1626 = vunpack.c.l.b16 %v1567
      %v1627 = vunpack.c.l.b16 %v1568
      %v1628 = vunpack.c.l.b16 %v1569
      %v1629 = vunpack.c.l.b16 %v1570
      %v1630 = vunpack.c.l.b16 %v1571
      %v1631 = vunpack.c.l.b16 %v1572
      %v1632 = vunpack.c.l.b16 %v1573
      %v1633 = vunpack.c.l.b16 %v1574
      %v1634 = vunpack.c.l.b16 %v1575
      %v1635 = vunpack.c.l.b16 %v1576
      %v1636 = vunpack.c.l.b16 %v1577
      %v1637 = vunpack.c.l.b16 %v1578
      %v1638 = vunpack.c.l.b16 %v1579
      %v1639 = vunpack.c.l.b16 %v1580
      %v1640 = vunpack.c.l.b16 %v1581
      %v1641 = vunpack.c.l.b16 %v1582
      %v1642 = vunpack.c.l.b16 %v1583
      %v1643 = vunpack.c.l.b16 %v1584
      %v1644 = vunpack.c.l.b16 %v1585
      %v1645 = vunpack.c.l.b16 %v1586
      %v1646 = vunpack.c.l.b16 %v1587
      %v1647 = vunpack.c.l.b16 %v1588
      %v1648 = vpack.c.b16 %v1620, %v1619
      %v1649 = vpack.c.b16 %v1622, %v1621
      %v1650 = vpack.c.b16 %v1624, %v1623
      %v1651 = vpack.c.b16 %v1626, %v1625
      %v1652 = vpack.c.b16 %v1628, %v1627
      %v1653 = vpack.c.b16 %v1630, %v1629
      %v1654 = vpack.c.b16 %v1632, %v1631
      %v1655 = vpack.c.b16 %v1634, %v1633
      %v1656 = vpack.c.b16 %v1636, %v1635
      %v1657 = vpack.c.b16 %v1638, %v1637
      %v1658 = vpack.c.b16 %v1640, %v1639
      %v1659 = vpack.c.b16 %v1642, %v1641
      %v1660 = vpack.c.b16 %v1644, %v1643
      %v1661 = vpack.c.b16 %v1646, %v1645
      %v1662 = vpack.c.b16 %v1647, %v1647
      %vm1663 = vcmask 1045504
      %v1664 = vrot.slane %v1648, 2
      %v1665 = vrot.slane %v1649, 2
      %v1666 = vsel %vm1663, %v1664, %v1665
      %v1667 = vrot.slane %v1650, 2
      %v1668 = vsel %vm1663, %v1665, %v1667
      %v1669 = vrot.slane %v1651, 2
      %v1670 = vsel %vm1663, %v1667, %v1669
      %v1671 = vrot.slane %v1652, 2
      %v1672 = vsel %vm1663, %v1669, %v1671
      %v1673 = vrot.slane %v1653, 2
      %v1674 = vsel %vm1663, %v1671, %v1673
      %v1675 = vrot.slane %v1654, 2
      %v1676 = vsel %vm1663, %v1673, %v1675
      %v1677 = vrot.slane %v1655, 2
      %v1678 = vsel %vm1663, %v1675, %v1677
      %v1679 = vrot.slane %v1656, 2
      %v1680 = vsel %vm1663, %v1677, %v1679
      %v1681 = vrot.slane %v1657, 2
      %v1682 = vsel %vm1663, %v1679, %v1681
      %v1683 = vrot.slane %v1658, 2
      %v1684 = vsel %vm1663, %v1681, %v1683
      %v1685 = vrot.slane %v1659, 2
      %v1686 = vsel %vm1663, %v1683, %v1685
      %v1687 = vrot.slane %v1660, 2
      %v1688 = vsel %vm1663, %v1685, %v1687
      %v1689 = vrot.slane %v1661, 2
      %v1690 = vsel %vm1663, %v1687, %v1689
      %v1691 = vrot.slane %v1662, 2
      %v1692 = vsel %vm1663, %v1689, %v1691
      %v1694 = vsel %vm393, %v1666, 0
      %v1697 = vsel %vm393, %v1668, 0
      %v1700 = vsel %vm393, %v1670, 0
      %v1703 = vsel %vm393, %v1672, 0
      %v1706 = vsel %vm393, %v1674, 0
      %v1709 = vsel %vm393, %v1676, 0
      %v1712 = vsel %vm393, %v1678, 0
      %v1715 = vsel %vm393, %v1680, 0
      %v1718 = vsel %vm393, %v1682, 0
      %v1721 = vsel %vm393, %v1684, 0
      %v1724 = vsel %vm393, %v1686, 0
      %v1727 = vsel %vm393, %v1688, 0
      %v1730 = vsel %vm393, %v1690, 0
      %v1733 = vsel %vm393, %v1692, 0
      %v1736 = vsel %vm436, %v1589, 0
      %1738 = vmatpush.bf16.msra.mxu0 0
      %1739 = vmatpush.bf16.msra.mxu0 0
      %1740 = vmatpush.bf16.msra.mxu0 0
      %1741 = vmatpush.bf16.msra.mxu0 0
      %1742 = vmatpush.bf16.msra.mxu0 0
      %1743 = vmatpush.bf16.msra.mxu0 0
      %1744 = vmatpush.bf16.msra.mxu0 0
      %1745 = vmatpush.bf16.msra.mxu0 %v1736
      %1746 = vmatmul.bf16.gmra.mxu0 %v1694
      %v1747 = vpop.f32.mrf.mxu0
      %v1748 = vadd.f32 0.0, %v1747
      %v1749 = vpop.f32.mrf.mxu0
      %v1750 = vadd.f32 0.0, %v1749
      %1751 = vmatmul.bf16.gmra.mxu0 %v1697
      %v1752 = vpop.f32.mrf.mxu0
      %v1753 = vadd.f32 0.0, %v1752
      %v1754 = vpop.f32.mrf.mxu0
      %v1755 = vadd.f32 0.0, %v1754
      %1756 = vmatmul.bf16.gmra.mxu0 %v1700
      %v1757 = vpop.f32.mrf.mxu0
      %v1758 = vadd.f32 0.0, %v1757
      %v1759 = vpop.f32.mrf.mxu0
      %v1760 = vadd.f32 0.0, %v1759
      %1761 = vmatmul.bf16.gmra.mxu0 %v1703
      %v1762 = vpop.f32.mrf.mxu0
      %v1763 = vadd.f32 0.0, %v1762
      %v1764 = vpop.f32.mrf.mxu0
      %v1765 = vadd.f32 0.0, %v1764
      %1766 = vmatmul.bf16.gmra.mxu0 %v1706
      %v1767 = vpop.f32.mrf.mxu0
      %v1768 = vadd.f32 0.0, %v1767
      %v1769 = vpop.f32.mrf.mxu0
      %v1770 = vadd.f32 0.0, %v1769
      %1771 = vmatmul.bf16.gmra.mxu0 %v1709
      %v1772 = vpop.f32.mrf.mxu0
      %v1773 = vadd.f32 0.0, %v1772
      %v1774 = vpop.f32.mrf.mxu0
      %v1775 = vadd.f32 0.0, %v1774
      %1776 = vmatmul.bf16.gmra.mxu0 %v1712
      %v1777 = vpop.f32.mrf.mxu0
      %v1778 = vadd.f32 0.0, %v1777
      %v1779 = vpop.f32.mrf.mxu0
      %v1780 = vadd.f32 0.0, %v1779
      %1781 = vmatmul.bf16.gmra.mxu0 %v1715
      %v1782 = vpop.f32.mrf.mxu0
      %v1783 = vadd.f32 0.0, %v1782
      %v1784 = vpop.f32.mrf.mxu0
      %v1785 = vadd.f32 0.0, %v1784
      %1786 = vmatmul.bf16.gmra.mxu0 %v1718
      %v1787 = vpop.f32.mrf.mxu0
      %v1788 = vadd.f32 0.0, %v1787
      %v1789 = vpop.f32.mrf.mxu0
      %v1790 = vadd.f32 0.0, %v1789
      %1791 = vmatmul.bf16.gmra.mxu0 %v1721
      %v1792 = vpop.f32.mrf.mxu0
      %v1793 = vadd.f32 0.0, %v1792
      %v1794 = vpop.f32.mrf.mxu0
      %v1795 = vadd.f32 0.0, %v1794
      %1796 = vmatmul.bf16.gmra.mxu0 %v1724
      %v1797 = vpop.f32.mrf.mxu0
      %v1798 = vadd.f32 0.0, %v1797
      %v1799 = vpop.f32.mrf.mxu0
      %v1800 = vadd.f32 0.0, %v1799
      %1801 = vmatmul.bf16.gmra.mxu0 %v1727
      %v1802 = vpop.f32.mrf.mxu0
      %v1803 = vadd.f32 0.0, %v1802
      %v1804 = vpop.f32.mrf.mxu0
      %v1805 = vadd.f32 0.0, %v1804
      %1806 = vmatmul.bf16.gmra.mxu0 %v1730
      %v1807 = vpop.f32.mrf.mxu0
      %v1808 = vadd.f32 0.0, %v1807
      %v1809 = vpop.f32.mrf.mxu0
      %v1810 = vadd.f32 0.0, %v1809
      %1811 = vmatmul.bf16.gmra.mxu0 %v1733
      %v1812 = vpop.f32.mrf.mxu0
      %v1813 = vadd.f32 0.0, %v1812
      %v1814 = vpop.f32.mrf.mxu0
      %v1815 = vadd.f32 0.0, %v1814
      %1816 = vdwg.mxu0
      %v1817 = vadd.f32 %v1532, %v1748
      %v1818 = vadd.f32 %v1533, %v1750
      %v1819 = vadd.f32 %v1534, %v1753
      %v1820 = vadd.f32 %v1535, %v1755
      %v1821 = vadd.f32 %v1536, %v1758
      %v1822 = vadd.f32 %v1537, %v1760
      %v1823 = vadd.f32 %v1538, %v1763
      %v1824 = vadd.f32 %v1539, %v1765
      %v1825 = vadd.f32 %v1540, %v1768
      %v1826 = vadd.f32 %v1541, %v1770
      %v1827 = vadd.f32 %v1542, %v1773
      %v1828 = vadd.f32 %v1543, %v1775
      %v1829 = vadd.f32 %v1544, %v1778
      %v1830 = vadd.f32 %v1545, %v1780
      %v1831 = vadd.f32 %v1546, %v1783
      %v1832 = vadd.f32 %v1547, %v1785
      %v1833 = vadd.f32 %v1548, %v1788
      %v1834 = vadd.f32 %v1549, %v1790
      %v1835 = vadd.f32 %v1550, %v1793
      %v1836 = vadd.f32 %v1551, %v1795
      %v1837 = vadd.f32 %v1552, %v1798
      %v1838 = vadd.f32 %v1553, %v1800
      %v1839 = vadd.f32 %v1554, %v1803
      %v1840 = vadd.f32 %v1555, %v1805
      %v1841 = vadd.f32 %v1556, %v1808
      %v1842 = vadd.f32 %v1557, %v1810
      %v1843 = vadd.f32 %v1558, %v1813
      %v1844 = vadd.f32 %v1559, %v1815
      %v1845 = vld [vmem:[%s165 + $0x7c] sm:$0x7]
      %v1846 = vld [vmem:[%s1 + $0x1c] sm:$0xf]
      %v1848 = vunpack.c.l.b16 %v1845
      %v1849 = vpack.c.b16 %v1848, %v1848
      %vm1850 = vsmask.f32 5376
      %v1852 = vshrl.u32 %v1648, 16
      %v1854 = vrot.slane %v1852, 2
      %v1855 = vshll.u32 %v1648, 16
      %v1857 = vrot.slane %v1855, 3
      %v1858 = vor.u32 %v1854, %v1857
      %v1860 = vshrl.u32 %v1649, 16
      %v1862 = vrot.slane %v1860, 2
      %v1863 = vshll.u32 %v1649, 16
      %v1865 = vrot.slane %v1863, 3
      %v1866 = vor.u32 %v1862, %v1865
      %v1867 = vsel %vm1850, %v1858, %v1866
      %v1869 = vshrl.u32 %v1650, 16
      %v1871 = vrot.slane %v1869, 2
      %v1872 = vshll.u32 %v1650, 16
      %v1874 = vrot.slane %v1872, 3
      %v1875 = vor.u32 %v1871, %v1874
      %v1876 = vsel %vm1850, %v1866, %v1875
      %v1878 = vshrl.u32 %v1651, 16
      %v1880 = vrot.slane %v1878, 2
      %v1881 = vshll.u32 %v1651, 16
      %v1883 = vrot.slane %v1881, 3
      %v1884 = vor.u32 %v1880, %v1883
      %v1885 = vsel %vm1850, %v1875, %v1884
      %v1887 = vshrl.u32 %v1652, 16
      %v1889 = vrot.slane %v1887, 2
      %v1890 = vshll.u32 %v1652, 16
      %v1892 = vrot.slane %v1890, 3
      %v1893 = vor.u32 %v1889, %v1892
      %v1894 = vsel %vm1850, %v1884, %v1893
      %v1896 = vshrl.u32 %v1653, 16
      %v1898 = vrot.slane %v1896, 2
      %v1899 = vshll.u32 %v1653, 16
      %v1901 = vrot.slane %v1899, 3
      %v1902 = vor.u32 %v1898, %v1901
      %v1903 = vsel %vm1850, %v1893, %v1902
      %v1905 = vshrl.u32 %v1654, 16
      %v1907 = vrot.slane %v1905, 2
      %v1908 = vshll.u32 %v1654, 16
      %v1910 = vrot.slane %v1908, 3
      %v1911 = vor.u32 %v1907, %v1910
      %v1912 = vsel %vm1850, %v1902, %v1911
      %v1914 = vshrl.u32 %v1655, 16
      %v1916 = vrot.slane %v1914, 2
      %v1917 = vshll.u32 %v1655, 16
      %v1919 = vrot.slane %v1917, 3
      %v1920 = vor.u32 %v1916, %v1919
      %v1921 = vsel %vm1850, %v1911, %v1920
      %v1923 = vshrl.u32 %v1656, 16
      %v1925 = vrot.slane %v1923, 2
      %v1926 = vshll.u32 %v1656, 16
      %v1928 = vrot.slane %v1926, 3
      %v1929 = vor.u32 %v1925, %v1928
      %v1930 = vsel %vm1850, %v1920, %v1929
      %v1932 = vshrl.u32 %v1657, 16
      %v1934 = vrot.slane %v1932, 2
      %v1935 = vshll.u32 %v1657, 16
      %v1937 = vrot.slane %v1935, 3
      %v1938 = vor.u32 %v1934, %v1937
      %v1939 = vsel %vm1850, %v1929, %v1938
      %v1941 = vshrl.u32 %v1658, 16
      %v1943 = vrot.slane %v1941, 2
      %v1944 = vshll.u32 %v1658, 16
      %v1946 = vrot.slane %v1944, 3
      %v1947 = vor.u32 %v1943, %v1946
      %v1948 = vsel %vm1850, %v1938, %v1947
      %v1950 = vshrl.u32 %v1659, 16
      %v1952 = vrot.slane %v1950, 2
      %v1953 = vshll.u32 %v1659, 16
      %v1955 = vrot.slane %v1953, 3
      %v1956 = vor.u32 %v1952, %v1955
      %v1957 = vsel %vm1850, %v1947, %v1956
      %v1959 = vshrl.u32 %v1660, 16
      %v1961 = vrot.slane %v1959, 2
      %v1962 = vshll.u32 %v1660, 16
      %v1964 = vrot.slane %v1962, 3
      %v1965 = vor.u32 %v1961, %v1964
      %v1966 = vsel %vm1850, %v1956, %v1965
      %v1968 = vshrl.u32 %v1661, 16
      %v1970 = vrot.slane %v1968, 2
      %v1971 = vshll.u32 %v1661, 16
      %v1973 = vrot.slane %v1971, 3
      %v1974 = vor.u32 %v1970, %v1973
      %v1975 = vsel %vm1850, %v1965, %v1974
      %v1977 = vshrl.u32 %v1849, 16
      %v1979 = vrot.slane %v1977, 2
      %v1980 = vshll.u32 %v1849, 16
      %v1982 = vrot.slane %v1980, 3
      %v1983 = vor.u32 %v1979, %v1982
      %v1984 = vsel %vm1850, %v1974, %v1983
      %v1986 = vsel %vm393, %v1867, 0
      %v1989 = vsel %vm393, %v1876, 0
      %v1992 = vsel %vm393, %v1885, 0
      %v1995 = vsel %vm393, %v1894, 0
      %v1998 = vsel %vm393, %v1903, 0
      %v2001 = vsel %vm393, %v1912, 0
      %v2004 = vsel %vm393, %v1921, 0
      %v2007 = vsel %vm393, %v1930, 0
      %v2010 = vsel %vm393, %v1939, 0
      %v2013 = vsel %vm393, %v1948, 0
      %v2016 = vsel %vm393, %v1957, 0
      %v2019 = vsel %vm393, %v1966, 0
      %v2022 = vsel %vm393, %v1975, 0
      %v2025 = vsel %vm393, %v1984, 0
      %v2028 = vsel %vm436, %v1846, 0
      %2030 = vmatpush.bf16.msra.mxu0 0
      %2031 = vmatpush.bf16.msra.mxu0 0
      %2032 = vmatpush.bf16.msra.mxu0 0
      %2033 = vmatpush.bf16.msra.mxu0 0
      %2034 = vmatpush.bf16.msra.mxu0 0
      %2035 = vmatpush.bf16.msra.mxu0 0
      %2036 = vmatpush.bf16.msra.mxu0 0
      %2037 = vmatpush.bf16.msra.mxu0 %v2028
      %2038 = vmatmul.bf16.gmra.mxu0 %v1986
      %v2039 = vpop.f32.mrf.mxu0
      %v2040 = vadd.f32 0.0, %v2039
      %v2041 = vpop.f32.mrf.mxu0
      %v2042 = vadd.f32 0.0, %v2041
      %2043 = vmatmul.bf16.gmra.mxu0 %v1989
      %v2044 = vpop.f32.mrf.mxu0
      %v2045 = vadd.f32 0.0, %v2044
      %v2046 = vpop.f32.mrf.mxu0
      %v2047 = vadd.f32 0.0, %v2046
      %2048 = vmatmul.bf16.gmra.mxu0 %v1992
      %v2049 = vpop.f32.mrf.mxu0
      %v2050 = vadd.f32 0.0, %v2049
      %v2051 = vpop.f32.mrf.mxu0
      %v2052 = vadd.f32 0.0, %v2051
      %2053 = vmatmul.bf16.gmra.mxu0 %v1995
      %v2054 = vpop.f32.mrf.mxu0
      %v2055 = vadd.f32 0.0, %v2054
      %v2056 = vpop.f32.mrf.mxu0
      %v2057 = vadd.f32 0.0, %v2056
      %2058 = vmatmul.bf16.gmra.mxu0 %v1998
      %v2059 = vpop.f32.mrf.mxu0
      %v2060 = vadd.f32 0.0, %v2059
      %v2061 = vpop.f32.mrf.mxu0
      %v2062 = vadd.f32 0.0, %v2061
      %2063 = vmatmul.bf16.gmra.mxu0 %v2001
      %v2064 = vpop.f32.mrf.mxu0
      %v2065 = vadd.f32 0.0, %v2064
      %v2066 = vpop.f32.mrf.mxu0
      %v2067 = vadd.f32 0.0, %v2066
      %2068 = vmatmul.bf16.gmra.mxu0 %v2004
      %v2069 = vpop.f32.mrf.mxu0
      %v2070 = vadd.f32 0.0, %v2069
      %v2071 = vpop.f32.mrf.mxu0
      %v2072 = vadd.f32 0.0, %v2071
      %2073 = vmatmul.bf16.gmra.mxu0 %v2007
      %v2074 = vpop.f32.mrf.mxu0
      %v2075 = vadd.f32 0.0, %v2074
      %v2076 = vpop.f32.mrf.mxu0
      %v2077 = vadd.f32 0.0, %v2076
      %2078 = vmatmul.bf16.gmra.mxu0 %v2010
      %v2079 = vpop.f32.mrf.mxu0
      %v2080 = vadd.f32 0.0, %v2079
      %v2081 = vpop.f32.mrf.mxu0
      %v2082 = vadd.f32 0.0, %v2081
      %2083 = vmatmul.bf16.gmra.mxu0 %v2013
      %v2084 = vpop.f32.mrf.mxu0
      %v2085 = vadd.f32 0.0, %v2084
      %v2086 = vpop.f32.mrf.mxu0
      %v2087 = vadd.f32 0.0, %v2086
      %2088 = vmatmul.bf16.gmra.mxu0 %v2016
      %v2089 = vpop.f32.mrf.mxu0
      %v2090 = vadd.f32 0.0, %v2089
      %v2091 = vpop.f32.mrf.mxu0
      %v2092 = vadd.f32 0.0, %v2091
      %2093 = vmatmul.bf16.gmra.mxu0 %v2019
      %v2094 = vpop.f32.mrf.mxu0
      %v2095 = vadd.f32 0.0, %v2094
      %v2096 = vpop.f32.mrf.mxu0
      %v2097 = vadd.f32 0.0, %v2096
      %2098 = vmatmul.bf16.gmra.mxu0 %v2022
      %v2099 = vpop.f32.mrf.mxu0
      %v2100 = vadd.f32 0.0, %v2099
      %v2101 = vpop.f32.mrf.mxu0
      %v2102 = vadd.f32 0.0, %v2101
      %2103 = vmatmul.bf16.gmra.mxu0 %v2025
      %v2104 = vpop.f32.mrf.mxu0
      %v2105 = vadd.f32 0.0, %v2104
      %v2106 = vpop.f32.mrf.mxu0
      %v2107 = vadd.f32 0.0, %v2106
      %2108 = vdwg.mxu0
      %v2109 = vadd.f32 %v1817, %v2040
      %v2110 = vadd.f32 %v1818, %v2042
      %v2111 = vadd.f32 %v1819, %v2045
      %v2112 = vadd.f32 %v1820, %v2047
      %v2113 = vadd.f32 %v1821, %v2050
      %v2114 = vadd.f32 %v1822, %v2052
      %v2115 = vadd.f32 %v1823, %v2055
      %v2116 = vadd.f32 %v1824, %v2057
      %v2117 = vadd.f32 %v1825, %v2060
      %v2118 = vadd.f32 %v1826, %v2062
      %v2119 = vadd.f32 %v1827, %v2065
      %v2120 = vadd.f32 %v1828, %v2067
      %v2121 = vadd.f32 %v1829, %v2070
      %v2122 = vadd.f32 %v1830, %v2072
      %v2123 = vadd.f32 %v1831, %v2075
      %v2124 = vadd.f32 %v1832, %v2077
      %v2125 = vadd.f32 %v1833, %v2080
      %v2126 = vadd.f32 %v1834, %v2082
      %v2127 = vadd.f32 %v1835, %v2085
      %v2128 = vadd.f32 %v1836, %v2087
      %v2129 = vadd.f32 %v1837, %v2090
      %v2130 = vadd.f32 %v1838, %v2092
      %v2131 = vadd.f32 %v1839, %v2095
      %v2132 = vadd.f32 %v1840, %v2097
      %v2133 = vadd.f32 %v1841, %v2100
      %v2134 = vadd.f32 %v1842, %v2102
      %v2135 = vadd.f32 %v1843, %v2105
      %v2136 = vadd.f32 %v1844, %v2107
      %v2137 = vld [vmem:[%s165 + $0xc] sm:$0x8]
      %v2138 = vld [vmem:[%s1 + $0x20] sm:$0xf]
      %v2140 = vunpack.c.l.b16 %v2137
      %v2141 = vpack.c.b16 %v1620, %v2140
      %v2142 = vrot.slane %v2141, 3
      %v2143 = vrot.slane %v1649, 3
      %v2144 = vsel %vm919, %v2142, %v2143
      %v2145 = vrot.slane %v1650, 3
      %v2146 = vsel %vm919, %v2143, %v2145
      %v2147 = vrot.slane %v1651, 3
      %v2148 = vsel %vm919, %v2145, %v2147
      %v2149 = vrot.slane %v1652, 3
      %v2150 = vsel %vm919, %v2147, %v2149
      %v2151 = vrot.slane %v1653, 3
      %v2152 = vsel %vm919, %v2149, %v2151
      %v2153 = vrot.slane %v1654, 3
      %v2154 = vsel %vm919, %v2151, %v2153
      %v2155 = vrot.slane %v1655, 3
      %v2156 = vsel %vm919, %v2153, %v2155
      %v2157 = vrot.slane %v1656, 3
      %v2158 = vsel %vm919, %v2155, %v2157
      %v2159 = vrot.slane %v1657, 3
      %v2160 = vsel %vm919, %v2157, %v2159
      %v2161 = vrot.slane %v1658, 3
      %v2162 = vsel %vm919, %v2159, %v2161
      %v2163 = vrot.slane %v1659, 3
      %v2164 = vsel %vm919, %v2161, %v2163
      %v2165 = vrot.slane %v1660, 3
      %v2166 = vsel %vm919, %v2163, %v2165
      %v2167 = vrot.slane %v1661, 3
      %v2168 = vsel %vm919, %v2165, %v2167
      %v2169 = vrot.slane %v1849, 3
      %v2170 = vsel %vm919, %v2167, %v2169
      %v2172 = vsel %vm393, %v2144, 0
      %v2175 = vsel %vm393, %v2146, 0
      %v2178 = vsel %vm393, %v2148, 0
      %v2181 = vsel %vm393, %v2150, 0
      %v2184 = vsel %vm393, %v2152, 0
      %v2187 = vsel %vm393, %v2154, 0
      %v2190 = vsel %vm393, %v2156, 0
      %v2193 = vsel %vm393, %v2158, 0
      %v2196 = vsel %vm393, %v2160, 0
      %v2199 = vsel %vm393, %v2162, 0
      %v2202 = vsel %vm393, %v2164, 0
      %v2205 = vsel %vm393, %v2166, 0
      %v2208 = vsel %vm393, %v2168, 0
      %v2211 = vsel %vm393, %v2170, 0
      %v2214 = vsel %vm436, %v2138, 0
      %2216 = vmatpush.bf16.msra.mxu0 0
      %2217 = vmatpush.bf16.msra.mxu0 0
      %2218 = vmatpush.bf16.msra.mxu0 0
      %2219 = vmatpush.bf16.msra.mxu0 0
      %2220 = vmatpush.bf16.msra.mxu0 0
      %2221 = vmatpush.bf16.msra.mxu0 0
      %2222 = vmatpush.bf16.msra.mxu0 0
      %2223 = vmatpush.bf16.msra.mxu0 %v2214
      %2224 = vmatmul.bf16.gmra.mxu0 %v2172
      %v2225 = vpop.f32.mrf.mxu0
      %v2226 = vadd.f32 0.0, %v2225
      %v2227 = vpop.f32.mrf.mxu0
      %v2228 = vadd.f32 0.0, %v2227
      %2229 = vmatmul.bf16.gmra.mxu0 %v2175
      %v2230 = vpop.f32.mrf.mxu0
      %v2231 = vadd.f32 0.0, %v2230
      %v2232 = vpop.f32.mrf.mxu0
      %v2233 = vadd.f32 0.0, %v2232
      %2234 = vmatmul.bf16.gmra.mxu0 %v2178
      %v2235 = vpop.f32.mrf.mxu0
      %v2236 = vadd.f32 0.0, %v2235
      %v2237 = vpop.f32.mrf.mxu0
      %v2238 = vadd.f32 0.0, %v2237
      %2239 = vmatmul.bf16.gmra.mxu0 %v2181
      %v2240 = vpop.f32.mrf.mxu0
      %v2241 = vadd.f32 0.0, %v2240
      %v2242 = vpop.f32.mrf.mxu0
      %v2243 = vadd.f32 0.0, %v2242
      %2244 = vmatmul.bf16.gmra.mxu0 %v2184
      %v2245 = vpop.f32.mrf.mxu0
      %v2246 = vadd.f32 0.0, %v2245
      %v2247 = vpop.f32.mrf.mxu0
      %v2248 = vadd.f32 0.0, %v2247
      %2249 = vmatmul.bf16.gmra.mxu0 %v2187
      %v2250 = vpop.f32.mrf.mxu0
      %v2251 = vadd.f32 0.0, %v2250
      %v2252 = vpop.f32.mrf.mxu0
      %v2253 = vadd.f32 0.0, %v2252
      %2254 = vmatmul.bf16.gmra.mxu0 %v2190
      %v2255 = vpop.f32.mrf.mxu0
      %v2256 = vadd.f32 0.0, %v2255
      %v2257 = vpop.f32.mrf.mxu0
      %v2258 = vadd.f32 0.0, %v2257
      %2259 = vmatmul.bf16.gmra.mxu0 %v2193
      %v2260 = vpop.f32.mrf.mxu0
      %v2261 = vadd.f32 0.0, %v2260
      %v2262 = vpop.f32.mrf.mxu0
      %v2263 = vadd.f32 0.0, %v2262
      %2264 = vmatmul.bf16.gmra.mxu0 %v2196
      %v2265 = vpop.f32.mrf.mxu0
      %v2266 = vadd.f32 0.0, %v2265
      %v2267 = vpop.f32.mrf.mxu0
      %v2268 = vadd.f32 0.0, %v2267
      %2269 = vmatmul.bf16.gmra.mxu0 %v2199
      %v2270 = vpop.f32.mrf.mxu0
      %v2271 = vadd.f32 0.0, %v2270
      %v2272 = vpop.f32.mrf.mxu0
      %v2273 = vadd.f32 0.0, %v2272
      %2274 = vmatmul.bf16.gmra.mxu0 %v2202
      %v2275 = vpop.f32.mrf.mxu0
      %v2276 = vadd.f32 0.0, %v2275
      %v2277 = vpop.f32.mrf.mxu0
      %v2278 = vadd.f32 0.0, %v2277
      %2279 = vmatmul.bf16.gmra.mxu0 %v2205
      %v2280 = vpop.f32.mrf.mxu0
      %v2281 = vadd.f32 0.0, %v2280
      %v2282 = vpop.f32.mrf.mxu0
      %v2283 = vadd.f32 0.0, %v2282
      %2284 = vmatmul.bf16.gmra.mxu0 %v2208
      %v2285 = vpop.f32.mrf.mxu0
      %v2286 = vadd.f32 0.0, %v2285
      %v2287 = vpop.f32.mrf.mxu0
      %v2288 = vadd.f32 0.0, %v2287
      %2289 = vmatmul.bf16.gmra.mxu0 %v2211
      %v2290 = vpop.f32.mrf.mxu0
      %v2291 = vadd.f32 0.0, %v2290
      %v2292 = vpop.f32.mrf.mxu0
      %v2293 = vadd.f32 0.0, %v2292
      %2294 = vdwg.mxu0
      %v2295 = vadd.f32 %v2109, %v2226
      %v2296 = vadd.f32 %v2110, %v2228
      %v2297 = vadd.f32 %v2111, %v2231
      %v2298 = vadd.f32 %v2112, %v2233
      %v2299 = vadd.f32 %v2113, %v2236
      %v2300 = vadd.f32 %v2114, %v2238
      %v2301 = vadd.f32 %v2115, %v2241
      %v2302 = vadd.f32 %v2116, %v2243
      %v2303 = vadd.f32 %v2117, %v2246
      %v2304 = vadd.f32 %v2118, %v2248
      %v2305 = vadd.f32 %v2119, %v2251
      %v2306 = vadd.f32 %v2120, %v2253
      %v2307 = vadd.f32 %v2121, %v2256
      %v2308 = vadd.f32 %v2122, %v2258
      %v2309 = vadd.f32 %v2123, %v2261
      %v2310 = vadd.f32 %v2124, %v2263
      %v2311 = vadd.f32 %v2125, %v2266
      %v2312 = vadd.f32 %v2126, %v2268
      %v2313 = vadd.f32 %v2127, %v2271
      %v2314 = vadd.f32 %v2128, %v2273
      %v2315 = vadd.f32 %v2129, %v2276
      %v2316 = vadd.f32 %v2130, %v2278
      %v2317 = vadd.f32 %v2131, %v2281
      %v2318 = vadd.f32 %v2132, %v2283
      %v2319 = vadd.f32 %v2133, %v2286
      %v2320 = vadd.f32 %v2134, %v2288
      %v2321 = vadd.f32 %v2135, %v2291
      %v2322 = vadd.f32 %v2136, %v2293
      %v2323 = vld [vmem:[%s2] sm:$0x1]
      %v2325 = vperm.slane %v2323, 0
      %v2327 = vadd.f32 %v2295, %v2325
      %v2328 = vadd.f32 %v2296, %v2325
      %v2329 = vadd.f32 %v2297, %v2325
      %v2330 = vadd.f32 %v2298, %v2325
      %v2331 = vadd.f32 %v2299, %v2325
      %v2332 = vadd.f32 %v2300, %v2325
      %v2333 = vadd.f32 %v2301, %v2325
      %v2334 = vadd.f32 %v2302, %v2325
      %v2335 = vadd.f32 %v2303, %v2325
      %v2336 = vadd.f32 %v2304, %v2325
      %v2337 = vadd.f32 %v2305, %v2325
      %v2338 = vadd.f32 %v2306, %v2325
      %v2339 = vadd.f32 %v2307, %v2325
      %v2340 = vadd.f32 %v2308, %v2325
      %v2341 = vadd.f32 %v2309, %v2325
      %v2342 = vadd.f32 %v2310, %v2325
      %v2343 = vadd.f32 %v2311, %v2325
      %v2344 = vadd.f32 %v2312, %v2325
      %v2345 = vadd.f32 %v2313, %v2325
      %v2346 = vadd.f32 %v2314, %v2325
      %v2347 = vadd.f32 %v2315, %v2325
      %v2348 = vadd.f32 %v2316, %v2325
      %v2349 = vadd.f32 %v2317, %v2325
      %v2350 = vadd.f32 %v2318, %v2325
      %v2351 = vadd.f32 %v2319, %v2325
      %v2352 = vadd.f32 %v2320, %v2325
      %v2353 = vadd.f32 %v2321, %v2325
      %v2354 = vadd.f32 %v2322, %v2325
      %vm2355 = vcmask 130048
      %2356 = vst.msk [vmem:[%s170] sm:$0xff] %vm2355, %v2327
      %2357 = vst.msk [vmem:[%s170 + $0x8] sm:$0xff] %vm2355, %v2328
      %2358 = vst.msk [vmem:[%s170 + $0x10] sm:$0xff] %vm2355, %v2329
      %2359 = vst.msk [vmem:[%s170 + $0x18] sm:$0xff] %vm2355, %v2330
      %2360 = vst.msk [vmem:[%s170 + $0x20] sm:$0xff] %vm2355, %v2331
      %2361 = vst.msk [vmem:[%s170 + $0x28] sm:$0xff] %vm2355, %v2332
      %2362 = vst.msk [vmem:[%s170 + $0x30] sm:$0xff] %vm2355, %v2333
      %2363 = vst.msk [vmem:[%s170 + $0x38] sm:$0xff] %vm2355, %v2334
      %2364 = vst.msk [vmem:[%s170 + $0x40] sm:$0xff] %vm2355, %v2335
      %2365 = vst.msk [vmem:[%s170 + $0x48] sm:$0xff] %vm2355, %v2336
      %2366 = vst.msk [vmem:[%s170 + $0x50] sm:$0xff] %vm2355, %v2337
      %2367 = vst.msk [vmem:[%s170 + $0x58] sm:$0xff] %vm2355, %v2338
      %2368 = vst.msk [vmem:[%s170 + $0x60] sm:$0xff] %vm2355, %v2339
      %2369 = vst.msk [vmem:[%s170 + $0x68] sm:$0xff] %vm2355, %v2340
      %2370 = vst.msk [vmem:[%s170 + $0x70] sm:$0xff] %vm2355, %v2341
      %2371 = vst.msk [vmem:[%s170 + $0x78] sm:$0xff] %vm2355, %v2342
      %2372 = vst.msk [vmem:[%s170 + $0x80] sm:$0xff] %vm2355, %v2343
      %2373 = vst.msk [vmem:[%s170 + $0x88] sm:$0xff] %vm2355, %v2344
      %2374 = vst.msk [vmem:[%s170 + $0x90] sm:$0xff] %vm2355, %v2345
      %2375 = vst.msk [vmem:[%s170 + $0x98] sm:$0xff] %vm2355, %v2346
      %2376 = vst.msk [vmem:[%s170 + $0xa0] sm:$0xff] %vm2355, %v2347
      %2377 = vst.msk [vmem:[%s170 + $0xa8] sm:$0xff] %vm2355, %v2348
      %2378 = vst.msk [vmem:[%s170 + $0xb0] sm:$0xff] %vm2355, %v2349
      %2379 = vst.msk [vmem:[%s170 + $0xb8] sm:$0xff] %vm2355, %v2350
      %2380 = vst.msk [vmem:[%s170 + $0xc0] sm:$0xff] %vm2355, %v2351
      %2381 = vst.msk [vmem:[%s170 + $0xc8] sm:$0xff] %vm2355, %v2352
      %2382 = vst.msk [vmem:[%s170 + $0xd0] sm:$0xff] %vm2355, %v2353
      %2383 = vst.msk [vmem:[%s170 + $0xd8] sm:$0xff] %vm2355, %v2354
      %p2384 = scmp.lt.s32.totalorder %s14, 1
      %s2385 = scalar_select %p2384, %s14, 1
      %s2386 = smul.addr %s2385, 28
      %s2387 = smul.addr %s2386, 8
      %s2388 = scalar_lea.vmem %s3, %s2387
      // Predicated region
      $region33: #{tpu_custom_call.1} parent=31 // pred_check
        %p2389 = pneg %p100
      $region34: #{tpu_custom_call.1} parent=31 // pred_check_branch
        %2391 = sbr.rel (%p2389) target = $region36
      $region35: #{tpu_custom_call.1} parent=31 // pred_region
        _
      $region36: #{tpu_custom_call.1} parent=31 // pred_fallthru
        _
    $region32: #{tpu_custom_call.1} parent=5 // pred_fallthru
      _
    %p2392 = scmp.le.s32.totalorder 2, %s9
    // Predicated region
    $region37: #{tpu_custom_call.1} parent=5 // pred_check
      %p2393 = pneg %p2392
    $region38: #{tpu_custom_call.1} parent=5 // pred_check_branch
      %2395 = sbr.rel (%p2393) target = $region40
    $region39: #{tpu_custom_call.1} parent=5 // pred_region
      %s2396 = ssub.s32 %s9, 2
      // Predicated region
      $region41: #{tpu_custom_call.1} parent=39 // pred_check
        %p2397 = pneg %p106
      $region42: #{tpu_custom_call.1} parent=39 // pred_check_branch
        %2399 = sbr.rel (%p2397) target = $region44
      $region43: #{tpu_custom_call.1} parent=39 // pred_region
        %p2400 = scmp.lt.s32.totalorder %s15, 1
        %s2401 = scalar_select %p2400, %s15, 1
        %s2402 = smul.addr %s2401, 28
        %s2403 = smul.addr %s2402, 8
        %s2404 = scalar_lea.vmem %s3, %s2403
      $region44: #{tpu_custom_call.1} parent=39 // pred_fallthru
        _
    $region40: #{tpu_custom_call.1} parent=5 // pred_fallthru
      _
  $region6: #{tpu_custom_call.1} parent=0 // loop_footer
    %s13 = sadd.s32 1, %s9
  $region7: #{tpu_custom_call.1} parent=0 // loop_footer_branch
    %8 = sbr.rel target = $region3
  $region8: #{tpu_custom_call.1} parent=0 // loop_exit
    _

</llo_original>
